<compile_context>
chip_gen: v5e
topology: v5e:2x2
jax: 0.10.0
libtpu: 0.0.40
codegen_flags: <defaults>
</compile_context>

<pallas_src>
import math
import functools

import jax
import jax.numpy as jnp
from jax.experimental import pallas as pl
from jax.experimental.pallas import tpu as pltpu


# Leave headroom under the v7x 64 MiB physical VMEM (also fine on v5e/v6e).
_VMEM_LIMIT = 48 * 1024 * 1024


def _pick_tile(dim, target, align):
    """Largest `align`-aligned divisor of `dim` that is <= target, else full dim."""
    if dim <= target:
        return dim
    t = (target // align) * align
    while t >= align:
        if dim % t == 0:
            return t
        t -= align
    return dim


# ----------------------------------------------------------------------------
# Tiled matmul (+ optional activation epilogue)
# ----------------------------------------------------------------------------

def _matmul_kernel(x_ref, w_ref, b_ref, o_ref, acc_ref, *, activation):
    k = pl.program_id(2)

    @pl.when(k == 0)
    def _():
        acc_ref[...] = jnp.zeros_like(acc_ref)

    acc_ref[...] += jnp.dot(x_ref[...], w_ref[...],
                            preferred_element_type=jnp.float32)

    @pl.when(k == pl.num_programs(2) - 1)
    def _():
        y = acc_ref[...] + b_ref[...].astype(jnp.float32)
        if activation == "tanh":
            y = jnp.tanh(y)
        elif activation == "gelu":
            # tanh-approx GELU.
            # TODO(synk): HF BERT uses exact erf GELU; tanh approximation here.
            y = 0.5 * y * (1.0 + jnp.tanh(
                0.7978845608028654 * (y + 0.044715 * y * y * y)))
        o_ref[...] = y.astype(o_ref.dtype)


def linear(x, w, b, activation=None, out_dtype=jnp.bfloat16,
           tm_target=256, tn_target=256, tk_target=512):
    """y = act(x @ w + b).  x:(M,K) bf16, w:(K,N) bf16, b:(N,) f32."""
    M, K = x.shape
    N = w.shape[1]
    tm = _pick_tile(M, tm_target, 8)
    tn = _pick_tile(N, tn_target, 128)
    tk = _pick_tile(K, tk_target, 128)
    grid = (M // tm, N // tn, K // tk)
    kernel = functools.partial(_matmul_kernel, activation=activation)
    return pl.pallas_call(
        kernel,
        out_shape=jax.ShapeDtypeStruct((M, N), out_dtype),
        grid=grid,
        in_specs=[
            pl.BlockSpec((tm, tk), lambda i, j, k: (i, k)),
            pl.BlockSpec((tk, tn), lambda i, j, k: (k, j)),
            pl.BlockSpec((1, tn), lambda i, j, k: (0, j)),
        ],
        out_specs=pl.BlockSpec((tm, tn), lambda i, j, k: (i, j)),
        scratch_shapes=[pltpu.VMEM((tm, tn), jnp.float32)],
        compiler_params=pltpu.CompilerParams(
            dimension_semantics=("parallel", "parallel", "arbitrary"),
            vmem_limit_bytes=_VMEM_LIMIT),
    )(x, w, b.reshape(1, N))


# ----------------------------------------------------------------------------
# Tiled matmul fused with residual-add + LayerNorm epilogue (full N per tile)
# ----------------------------------------------------------------------------

def _matmul_res_ln_kernel(x_ref, w_ref, b_ref, r_ref, g_ref, bb_ref,
                          o_ref, acc_ref):
    k = pl.program_id(1)

    @pl.when(k == 0)
    def _():
        acc_ref[...] = jnp.zeros_like(acc_ref)

    acc_ref[...] += jnp.dot(x_ref[...], w_ref[...],
                            preferred_element_type=jnp.float32)

    @pl.when(k == pl.num_programs(1) - 1)
    def _():
        y = (acc_ref[...] + b_ref[...].astype(jnp.float32)
             + r_ref[...].astype(jnp.float32))
        mean = jnp.mean(y, axis=-1, keepdims=True)
        yc = y - mean
        var = jnp.mean(yc * yc, axis=-1, keepdims=True)
        inv = jax.lax.rsqrt(var + 1e-12)
        o_ref[...] = ((yc * inv) * g_ref[...] + bb_ref[...]).astype(o_ref.dtype)


def linear_residual_layernorm(x, w, b, residual, gamma, beta,
                              out_dtype=jnp.bfloat16,
                              tm_target=256, tk_target=512):
    """LayerNorm(x @ w + b + residual).  N kept whole per tile (LN reduces over N)."""
    M, K = x.shape
    N = w.shape[1]
    tm = _pick_tile(M, tm_target, 8)
    tk = _pick_tile(K, tk_target, 128)
    grid = (M // tm, K // tk)
    return pl.pallas_call(
        _matmul_res_ln_kernel,
        out_shape=jax.ShapeDtypeStruct((M, N), out_dtype),
        grid=grid,
        in_specs=[
            pl.BlockSpec((tm, tk), lambda i, k: (i, k)),
            pl.BlockSpec((tk, N), lambda i, k: (k, 0)),
            pl.BlockSpec((1, N), lambda i, k: (0, 0)),
            pl.BlockSpec((tm, N), lambda i, k: (i, 0)),
            pl.BlockSpec((1, N), lambda i, k: (0, 0)),
            pl.BlockSpec((1, N), lambda i, k: (0, 0)),
        ],
        out_specs=pl.BlockSpec((tm, N), lambda i, k: (i, 0)),
        scratch_shapes=[pltpu.VMEM((tm, N), jnp.float32)],
        compiler_params=pltpu.CompilerParams(
            dimension_semantics=("parallel", "arbitrary"),
            vmem_limit_bytes=_VMEM_LIMIT),
    )(x, w, b.reshape(1, N), residual, gamma.reshape(1, N), beta.reshape(1, N))


# ----------------------------------------------------------------------------
# Standalone LayerNorm (embeddings)
# ----------------------------------------------------------------------------

def _layernorm_kernel(x_ref, g_ref, b_ref, o_ref):
    x = x_ref[...].astype(jnp.float32)
    mean = jnp.mean(x, axis=-1, keepdims=True)
    xc = x - mean
    var = jnp.mean(xc * xc, axis=-1, keepdims=True)
    inv = jax.lax.rsqrt(var + 1e-12)
    o_ref[...] = ((xc * inv) * g_ref[...] + b_ref[...]).astype(o_ref.dtype)


def layernorm(x, gamma, beta, out_dtype=jnp.bfloat16, tm_target=512):
    M, H = x.shape
    tm = _pick_tile(M, tm_target, 8)
    return pl.pallas_call(
        _layernorm_kernel,
        out_shape=jax.ShapeDtypeStruct((M, H), out_dtype),
        grid=(M // tm,),
        in_specs=[
            pl.BlockSpec((tm, H), lambda i: (i, 0)),
            pl.BlockSpec((1, H), lambda i: (0, 0)),
            pl.BlockSpec((1, H), lambda i: (0, 0)),
        ],
        out_specs=pl.BlockSpec((tm, H), lambda i: (i, 0)),
        compiler_params=pltpu.CompilerParams(
            dimension_semantics=("parallel",),
            vmem_limit_bytes=_VMEM_LIMIT),
    )(x, gamma.reshape(1, H), beta.reshape(1, H))


# ----------------------------------------------------------------------------
# Multi-head self-attention: one batch element per grid step, all heads inside
# ----------------------------------------------------------------------------

def _attention_kernel(qkv_ref, bias_ref, o_ref, *, n_heads, head_dim, scale):
    H = n_heads * head_dim
    qkv = qkv_ref[0]                          # (S, 3H) bf16 (already in VMEM)
    bias = bias_ref[0].astype(jnp.float32)    # (1, S) additive key mask
    ctx_heads = []
    for h in range(n_heads):                  # static unroll over heads
        q = qkv[:, h * head_dim:(h + 1) * head_dim]
        k = qkv[:, H + h * head_dim:H + (h + 1) * head_dim]
        v = qkv[:, 2 * H + h * head_dim:2 * H + (h + 1) * head_dim]
        # s = q @ k^T  (contract last dims; fp32 accumulate)
        s = jax.lax.dot_general(q, k, (((1,), (1,)), ((), ())),
                                preferred_element_type=jnp.float32)
        s = s * scale + bias
        s = s - jnp.max(s, axis=-1, keepdims=True)
        p = jnp.exp(s)
        p = p * pl.reciprocal(jnp.sum(p, axis=-1, keepdims=True), approx=True)
        ctx_heads.append(jnp.dot(p.astype(qkv.dtype), v,
                                 preferred_element_type=jnp.float32))
    o_ref[0] = jnp.concatenate(ctx_heads, axis=-1).astype(o_ref.dtype)


def attention(qkv, attn_bias, n_heads, head_dim):
    """qkv: (B, S, 3H) bf16; attn_bias: (B, 1, S) f32 additive key mask."""
    B, S, H3 = qkv.shape
    H = H3 // 3
    scale = 1.0 / math.sqrt(head_dim)
    kernel = functools.partial(_attention_kernel, n_heads=n_heads,
                               head_dim=head_dim, scale=scale)
    return pl.pallas_call(
        kernel,
        out_shape=jax.ShapeDtypeStruct((B, S, H), jnp.bfloat16),
        grid=(B,),
        in_specs=[
            pl.BlockSpec((1, S, H3), lambda b: (b, 0, 0)),
            pl.BlockSpec((1, 1, S), lambda b: (b, 0, 0)),
        ],
        out_specs=pl.BlockSpec((1, S, H), lambda b: (b, 0, 0)),
        compiler_params=pltpu.CompilerParams(
            dimension_semantics=("parallel",),
            vmem_limit_bytes=_VMEM_LIMIT),
    )(qkv, attn_bias)


# ----------------------------------------------------------------------------
# Parameter construction (deterministic, synthetic, pre-fused layout)
# ----------------------------------------------------------------------------

def init_params(key, *, vocab_size, max_pos, hidden, n_layers, n_heads,
                intermediate, intent_tag, slot_none_tag, slot_tag):
    keys = list(jax.random.split(key, 4 * n_layers + 8))
    it = iter(keys)

    def nrm(shape, dtype=jnp.bfloat16):
        return (0.02 * jax.random.normal(next(it), shape, jnp.float32)).astype(dtype)

    def zeros(shape):
        return jnp.zeros(shape, jnp.float32)

    def ones(shape):
        return jnp.ones(shape, jnp.float32)

    # classification heads: fuse (intent | slot_none), pad N up to lane width 128
    intent_w = 0.02 * jax.random.normal(next(it), (hidden, intent_tag), jnp.float32)
    slot_none_w = 0.02 * jax.random.normal(next(it), (hidden, slot_none_tag), jnp.float32)
    slot_w = 0.02 * jax.random.normal(next(it), (hidden, slot_tag), jnp.float32)

    def pad_cols(w, b):
        n = w.shape[1]
        n_pad = -(-n // 128) * 128
        return (jnp.pad(w, ((0, 0), (0, n_pad - n))).astype(jnp.bfloat16),
                jnp.pad(b, (0, n_pad - n)))

    head_pooled_w, head_pooled_b = pad_cols(
        jnp.concatenate([intent_w, slot_none_w], axis=1),
        jnp.zeros((intent_tag + slot_none_tag,), jnp.float32))
    slot_w_pad, slot_b_pad = pad_cols(slot_w, jnp.zeros((slot_tag,), jnp.float32))

    p = {
        "word_emb": nrm((vocab_size, hidden), jnp.float32),
        "pos_emb": nrm((max_pos, hidden), jnp.float32),
        "type_emb": nrm((2, hidden), jnp.float32),
        "emb_ln_g": ones((hidden,)), "emb_ln_b": zeros((hidden,)),
        "layers": [],
        "pooler_w": nrm((hidden, hidden)), "pooler_b": zeros((hidden,)),
        "head_pooled_w": head_pooled_w, "head_pooled_b": head_pooled_b,
        "slot_w": slot_w_pad, "slot_b": slot_b_pad,
    }
    for _ in range(n_layers):
        lyr = {
            # fused Q|K|V projection (H, 3H)
            "w_qkv": nrm((hidden, 3 * hidden)), "b_qkv": zeros((3 * hidden,)),
            "wo": nrm((hidden, hidden)), "bo": zeros((hidden,)),
            "attn_ln_g": ones((hidden,)), "attn_ln_b": zeros((hidden,)),
            "wi": nrm((hidden, intermediate)), "bi": zeros((intermediate,)),
            "wf": nrm((intermediate, hidden)), "bf": zeros((hidden,)),
            "ffn_ln_g": ones((hidden,)), "ffn_ln_b": zeros((hidden,)),
        }
        p["layers"].append(lyr)
    return p


# ----------------------------------------------------------------------------
# JointBertModel.forward
# ----------------------------------------------------------------------------

def joint_bert_forward(params, input_ids, input_mask, *, n_heads,
                       intent_tag, slot_none_tag, slot_tag):
    B, S = input_ids.shape
    H = params["word_emb"].shape[1]
    dh = H // n_heads

    # --- embeddings (gather/adds are XLA glue; LayerNorm is a Pallas kernel) --
    # token_type_ids assumed all-zero (segment 0), as in the reference usage.
    emb = (params["word_emb"][input_ids]
           + params["pos_emb"][:S][None, :, :]
           + params["type_emb"][0][None, None, :])              # (B, S, H) f32
    x = layernorm(emb.reshape(B * S, H),
                  params["emb_ln_g"], params["emb_ln_b"])        # (B*S, H) bf16

    # additive attention mask over keys, kept un-repeated: (B, 1, S) f32
    attn_bias = ((1.0 - input_mask.astype(jnp.float32)) * -1e9)[:, None, :]

    # --- transformer layers (5 fused pallas_calls per layer) ------------------
    for lyr in params["layers"]:
        qkv = linear(x, lyr["w_qkv"], lyr["b_qkv"])              # (B*S, 3H)
        ctx = attention(qkv.reshape(B, S, 3 * H), attn_bias, n_heads, dh)
        x = linear_residual_layernorm(ctx.reshape(B * S, H), lyr["wo"], lyr["bo"],
                                      x, lyr["attn_ln_g"], lyr["attn_ln_b"])
        inter = linear(x, lyr["wi"], lyr["bi"], activation="gelu")
        x = linear_residual_layernorm(inter, lyr["wf"], lyr["bf"],
                                      x, lyr["ffn_ln_g"], lyr["ffn_ln_b"])

    sequence_output = x                                          # (B*S, H) bf16
    cls = x.reshape(B, S, H)[:, 0, :]                            # (B, H)
    pooled_output = linear(cls, params["pooler_w"], params["pooler_b"],
                           activation="tanh")                    # (B, H) bf16

    # Dropout(p=0.5) -> identity at inference.
    # --- classification heads: fused + lane-padded, sliced in the wrapper -----
    pooled_logits = linear(pooled_output, params["head_pooled_w"],
                           params["head_pooled_b"], out_dtype=jnp.float32)
    intent_logits = pooled_logits[:, :intent_tag]
    slot_none_logits = pooled_logits[:, intent_tag:intent_tag + slot_none_tag]

    slot_logits = linear(sequence_output, params["slot_w"], params["slot_b"],
                         out_dtype=jnp.float32)[:, :slot_tag]
    slot_logits = slot_logits.reshape(B, S, slot_tag)
    return intent_logits, slot_none_logits, slot_logits


# ----------------------------------------------------------------------------
# Main
# ----------------------------------------------------------------------------

if __name__ == "__main__":
    # small, BERT-shaped toy config
    B, S = 2, 8
    HIDDEN = 32
    N_HEADS = 2
    N_LAYERS = 2
    INTERMEDIATE = 64
    VOCAB = 100
    MAX_POS = 64
    INTENT_TAGS = 5
    SLOT_NONE_TAGS = 3
    SLOT_TAGS = 7

    key = jax.random.PRNGKey(0)
    k_param, k_ids = jax.random.split(key)

    params = init_params(
        k_param, vocab_size=VOCAB, max_pos=MAX_POS, hidden=HIDDEN,
        n_layers=N_LAYERS, n_heads=N_HEADS, intermediate=INTERMEDIATE,
        intent_tag=INTENT_TAGS, slot_none_tag=SLOT_NONE_TAGS, slot_tag=SLOT_TAGS)

    input_ids = jax.random.randint(k_ids, (B, S), 0, VOCAB, dtype=jnp.int32)
    input_mask = jnp.array([[1, 1, 1, 1, 1, 1, 1, 1],
                            [1, 1, 1, 1, 1, 0, 0, 0]], dtype=jnp.int32)

    fwd = jax.jit(functools.partial(
        joint_bert_forward, n_heads=N_HEADS, intent_tag=INTENT_TAGS,
        slot_none_tag=SLOT_NONE_TAGS, slot_tag=SLOT_TAGS))
    intent_logits, slot_none_logits, slot_logits = fwd(params, input_ids, input_mask)
    jax.block_until_ready((intent_logits, slot_none_logits, slot_logits))

    assert intent_logits.shape == (B, INTENT_TAGS)
    assert slot_none_logits.shape == (B, SLOT_NONE_TAGS)
    assert slot_logits.shape == (B, S, SLOT_TAGS)
    print("KERNEL_OK")
</pallas_src>

<mosaic_0001>
module attributes {stable_mosaic.version = 11 : i64} {
  func.func @_attention_kernel(%arg0: i32, %arg1: memref<1x8x96xbf16, #tpu.memory_space<vmem>>, %arg2: memref<1x1x8xf32, #tpu.memory_space<vmem>>, %arg3: memref<1x8x32xbf16, #tpu.memory_space<vmem>>) attributes {dimension_semantics = [#tpu.dimension_semantics<parallel>], iteration_bounds = array<i64: 2>, scalar_prefetch = 0 : i64, scratch_operands = 0 : i64, tpu.core_type = #tpu.core_type<tc>, window_params = [{transform_indices = @transform_0, window_bounds = array<i64: 1, 8, 96>}, {transform_indices = @transform_1, window_bounds = array<i64: 1, 1, 8>}, {transform_indices = @transform_2, window_bounds = array<i64: 1, 8, 32>}]} {
    %c0 = arith.constant 0 : index
    %c0_0 = arith.constant 0 : index
    %c0_1 = arith.constant 0 : index
    %0 = vector.load %arg1[%c0, %c0_0, %c0_1] : memref<1x8x96xbf16, #tpu.memory_space<vmem>>, vector<1x8x96xbf16>
    %1 = vector.shape_cast %0 : vector<1x8x96xbf16> to vector<8x96xbf16>
    %c0_2 = arith.constant 0 : index
    %c0_3 = arith.constant 0 : index
    %c0_4 = arith.constant 0 : index
    %2 = vector.load %arg2[%c0_2, %c0_3, %c0_4] : memref<1x1x8xf32, #tpu.memory_space<vmem>>, vector<1x1x8xf32>
    %3 = vector.shape_cast %2 : vector<1x1x8xf32> to vector<1x8xf32>
    %4 = vector.extract_strided_slice %1 {offsets = [0, 0], sizes = [8, 16], strides = [1, 1]} : vector<8x96xbf16> to vector<8x16xbf16>
    %5 = vector.extract_strided_slice %1 {offsets = [0, 32], sizes = [8, 16], strides = [1, 1]} : vector<8x96xbf16> to vector<8x16xbf16>
    %6 = vector.extract_strided_slice %1 {offsets = [0, 64], sizes = [8, 16], strides = [1, 1]} : vector<8x96xbf16> to vector<8x16xbf16>
    %cst = arith.constant dense<0.000000e+00> : vector<8x8xf32>
    %7 = tpu.matmul %4, %5, %cst {dimension_numbers = #tpu.dot_dimension_numbers<[1], [1], [0], [0], [0, 0, 1, 0], [], []>} : vector<8x16xbf16>, vector<8x16xbf16>, vector<8x8xf32> -> vector<8x8xf32>
    %cst_5 = arith.constant 2.500000e-01 : f32
    %8 = vector.broadcast %cst_5 : f32 to vector<8x8xf32>
    %9 = arith.mulf %7, %8 : vector<8x8xf32>
    %10 = vector.broadcast %3 : vector<1x8xf32> to vector<8x8xf32>
    %11 = arith.addf %9, %10 : vector<8x8xf32>
    %cst_6 = arith.constant dense<0xFF800000> : vector<8xf32>
    %12 = vector.multi_reduction <maximumf>, %11, %cst_6 [1] : vector<8x8xf32> to vector<8xf32>
    %13 = vector.shape_cast %12 : vector<8xf32> to vector<8x1xf32>
    %14 = vector.broadcast %13 : vector<8x1xf32> to vector<8x8xf32>
    %15 = arith.subf %11, %14 : vector<8x8xf32>
    %16 = math.exp %15 : vector<8x8xf32>
    %cst_7 = arith.constant dense<0.000000e+00> : vector<8xf32>
    %17 = vector.multi_reduction <add>, %16, %cst_7 [1] : vector<8x8xf32> to vector<8xf32>
    %18 = vector.shape_cast %17 : vector<8xf32> to vector<8x1xf32>
    %19 = tpu.reciprocal %18 {approx = true} : vector<8x1xf32> -> vector<8x1xf32>
    %20 = vector.broadcast %19 : vector<8x1xf32> to vector<8x8xf32>
    %21 = arith.mulf %16, %20 : vector<8x8xf32>
    %22 = arith.truncf %21 : vector<8x8xf32> to vector<8x8xbf16>
    %cst_8 = arith.constant dense<0.000000e+00> : vector<8x16xf32>
    %23 = tpu.matmul %22, %6, %cst_8 {dimension_numbers = #tpu.dot_dimension_numbers<[1], [0], [0], [1], [0, 0, 1, 1], [], []>} : vector<8x8xbf16>, vector<8x16xbf16>, vector<8x16xf32> -> vector<8x16xf32>
    %24 = vector.extract_strided_slice %1 {offsets = [0, 16], sizes = [8, 16], strides = [1, 1]} : vector<8x96xbf16> to vector<8x16xbf16>
    %25 = vector.extract_strided_slice %1 {offsets = [0, 48], sizes = [8, 16], strides = [1, 1]} : vector<8x96xbf16> to vector<8x16xbf16>
    %26 = vector.extract_strided_slice %1 {offsets = [0, 80], sizes = [8, 16], strides = [1, 1]} : vector<8x96xbf16> to vector<8x16xbf16>
    %cst_9 = arith.constant dense<0.000000e+00> : vector<8x8xf32>
    %27 = tpu.matmul %24, %25, %cst_9 {dimension_numbers = #tpu.dot_dimension_numbers<[1], [1], [0], [0], [0, 0, 1, 0], [], []>} : vector<8x16xbf16>, vector<8x16xbf16>, vector<8x8xf32> -> vector<8x8xf32>
    %cst_10 = arith.constant 2.500000e-01 : f32
    %28 = vector.broadcast %cst_10 : f32 to vector<8x8xf32>
    %29 = arith.mulf %27, %28 : vector<8x8xf32>
    %30 = vector.broadcast %3 : vector<1x8xf32> to vector<8x8xf32>
    %31 = arith.addf %29, %30 : vector<8x8xf32>
    %cst_11 = arith.constant dense<0xFF800000> : vector<8xf32>
    %32 = vector.multi_reduction <maximumf>, %31, %cst_11 [1] : vector<8x8xf32> to vector<8xf32>
    %33 = vector.shape_cast %32 : vector<8xf32> to vector<8x1xf32>
    %34 = vector.broadcast %33 : vector<8x1xf32> to vector<8x8xf32>
    %35 = arith.subf %31, %34 : vector<8x8xf32>
    %36 = math.exp %35 : vector<8x8xf32>
    %cst_12 = arith.constant dense<0.000000e+00> : vector<8xf32>
    %37 = vector.multi_reduction <add>, %36, %cst_12 [1] : vector<8x8xf32> to vector<8xf32>
    %38 = vector.shape_cast %37 : vector<8xf32> to vector<8x1xf32>
    %39 = tpu.reciprocal %38 {approx = true} : vector<8x1xf32> -> vector<8x1xf32>
    %40 = vector.broadcast %39 : vector<8x1xf32> to vector<8x8xf32>
    %41 = arith.mulf %36, %40 : vector<8x8xf32>
    %42 = arith.truncf %41 : vector<8x8xf32> to vector<8x8xbf16>
    %cst_13 = arith.constant dense<0.000000e+00> : vector<8x16xf32>
    %43 = tpu.matmul %42, %26, %cst_13 {dimension_numbers = #tpu.dot_dimension_numbers<[1], [0], [0], [1], [0, 0, 1, 1], [], []>} : vector<8x8xbf16>, vector<8x16xbf16>, vector<8x16xf32> -> vector<8x16xf32>
    %44 = tpu.concatenate %23, %43 in 1 : vector<8x16xf32>, vector<8x16xf32> -> vector<8x32xf32>
    %45 = arith.truncf %44 : vector<8x32xf32> to vector<8x32xbf16>
    %c0_14 = arith.constant 0 : index
    %c0_15 = arith.constant 0 : index
    %c0_16 = arith.constant 0 : index
    %46 = vector.load %arg3[%c0_14, %c0_15, %c0_16] : memref<1x8x32xbf16, #tpu.memory_space<vmem>>, vector<1x8x32xbf16>
    %47 = vector.shape_cast %46 : vector<1x8x32xbf16> to vector<8x32xbf16>
    %48 = vector.shape_cast %45 : vector<8x32xbf16> to vector<1x8x32xbf16>
    tpu.vector_store %arg3[%c0_14, %c0_15, %c0_16], %48 {strides = array<i32>} : memref<1x8x32xbf16, #tpu.memory_space<vmem>>, vector<1x8x32xbf16>,
    return
  }
  func.func @transform_0(%arg0: i32) -> (i32, i32, i32) {
    %c0_i32 = arith.constant 0 : i32
    %c0_i32_0 = arith.constant 0 : i32
    %c0_i32_1 = arith.constant 0 : i32
    return %arg0, %c0_i32, %c0_i32_0 : i32, i32, i32
  }
  func.func @transform_1(%arg0: i32) -> (i32, i32, i32) {
    %c0_i32 = arith.constant 0 : i32
    %c0_i32_0 = arith.constant 0 : i32
    %c0_i32_1 = arith.constant 0 : i32
    return %arg0, %c0_i32, %c0_i32_0 : i32, i32, i32
  }
  func.func @transform_2(%arg0: i32) -> (i32, i32, i32) {
    %c0_i32 = arith.constant 0 : i32
    %c0_i32_0 = arith.constant 0 : i32
    %c0_i32_1 = arith.constant 0 : i32
    return %arg0, %c0_i32, %c0_i32_0 : i32, i32, i32
  }
}

module attributes {stable_mosaic.version = 11 : i64} {
  func.func @_matmul_kernel(%arg0: i32, %arg1: i32, %arg2: i32, %arg3: memref<16x32xbf16, #tpu.memory_space<vmem>>, %arg4: memref<32x96xbf16, #tpu.memory_space<vmem>>, %arg5: memref<1x96xf32, #tpu.memory_space<vmem>>, %arg6: memref<16x96xbf16, #tpu.memory_space<vmem>>, %arg7: memref<16x96xf32, #tpu.memory_space<vmem>>) attributes {dimension_semantics = [#tpu.dimension_semantics<parallel>, #tpu.dimension_semantics<parallel>, #tpu.dimension_semantics<arbitrary>], iteration_bounds = array<i64: 1, 1, 1>, scalar_prefetch = 0 : i64, scratch_operands = 1 : i64, tpu.core_type = #tpu.core_type<tc>, window_params = [{transform_indices = @transform_0, window_bounds = array<i64: 16, 32>}, {transform_indices = @transform_1, window_bounds = array<i64: 32, 96>}, {transform_indices = @transform_2, window_bounds = array<i64: 1, 96>}, {transform_indices = @transform_3, window_bounds = array<i64: 16, 96>}]} {
    %c0_i32 = arith.constant 0 : i32
    %0 = arith.cmpi eq, %arg2, %c0_i32 : i32
    %1 = arith.extui %0 : i1 to i32
    %c0_i32_0 = arith.constant 0 : i32
    %2 = arith.cmpi ne, %1, %c0_i32_0 : i32
    scf.if %2 {
      %cst_10 = arith.constant 0.000000e+00 : f32
      %12 = vector.broadcast %cst_10 : f32 to vector<16x96xf32>
      %c0_11 = arith.constant 0 : index
      %c0_12 = arith.constant 0 : index
      %13 = vector.load %arg7[%c0_11, %c0_12] : memref<16x96xf32, #tpu.memory_space<vmem>>, vector<16x96xf32>
      tpu.vector_store %arg7[%c0_11, %c0_12], %12 {strides = array<i32>} : memref<16x96xf32, #tpu.memory_space<vmem>>, vector<16x96xf32>,
    } else {
    }
    %c0 = arith.constant 0 : index
    %c0_1 = arith.constant 0 : index
    %3 = vector.load %arg7[%c0, %c0_1] : memref<16x96xf32, #tpu.memory_space<vmem>>, vector<16x96xf32>
    %c0_2 = arith.constant 0 : index
    %c0_3 = arith.constant 0 : index
    %4 = vector.load %arg3[%c0_2, %c0_3] : memref<16x32xbf16, #tpu.memory_space<vmem>>, vector<16x32xbf16>
    %c0_4 = arith.constant 0 : index
    %c0_5 = arith.constant 0 : index
    %5 = vector.load %arg4[%c0_4, %c0_5] : memref<32x96xbf16, #tpu.memory_space<vmem>>, vector<32x96xbf16>
    %cst = arith.constant dense<0.000000e+00> : vector<16x96xf32>
    %6 = tpu.matmul %4, %5, %cst {dimension_numbers = #tpu.dot_dimension_numbers<[1], [0], [0], [1], [0, 0, 1, 1], [], []>} : vector<16x32xbf16>, vector<32x96xbf16>, vector<16x96xf32> -> vector<16x96xf32>
    %7 = arith.addf %3, %6 : vector<16x96xf32>
    %c0_6 = arith.constant 0 : index
    %c0_7 = arith.constant 0 : index
    %8 = vector.load %arg7[%c0_6, %c0_7] : memref<16x96xf32, #tpu.memory_space<vmem>>, vector<16x96xf32>
    tpu.vector_store %arg7[%c0_6, %c0_7], %7 {strides = array<i32>} : memref<16x96xf32, #tpu.memory_space<vmem>>, vector<16x96xf32>,
    %c0_i32_8 = arith.constant 0 : i32
    %9 = arith.cmpi eq, %arg2, %c0_i32_8 : i32
    %10 = arith.extui %9 : i1 to i32
    %c0_i32_9 = arith.constant 0 : i32
    %11 = arith.cmpi ne, %10, %c0_i32_9 : i32
    scf.if %11 {
      %c0_10 = arith.constant 0 : index
      %c0_11 = arith.constant 0 : index
      %12 = vector.load %arg7[%c0_10, %c0_11] : memref<16x96xf32, #tpu.memory_space<vmem>>, vector<16x96xf32>
      %c0_12 = arith.constant 0 : index
      %c0_13 = arith.constant 0 : index
      %13 = vector.load %arg5[%c0_12, %c0_13] : memref<1x96xf32, #tpu.memory_space<vmem>>, vector<1x96xf32>
      %14 = vector.broadcast %13 : vector<1x96xf32> to vector<16x96xf32>
      %15 = arith.addf %12, %14 : vector<16x96xf32>
      %16 = arith.truncf %15 : vector<16x96xf32> to vector<16x96xbf16>
      %c0_14 = arith.constant 0 : index
      %c0_15 = arith.constant 0 : index
      %17 = vector.load %arg6[%c0_14, %c0_15] : memref<16x96xbf16, #tpu.memory_space<vmem>>, vector<16x96xbf16>
      tpu.vector_store %arg6[%c0_14, %c0_15], %16 {strides = array<i32>} : memref<16x96xbf16, #tpu.memory_space<vmem>>, vector<16x96xbf16>,
    } else {
    }
    return
  }
  func.func @transform_0(%arg0: i32, %arg1: i32, %arg2: i32) -> (i32, i32) {
    %c0_i32 = arith.constant 0 : i32
    return %arg0, %arg2 : i32, i32
  }
  func.func @transform_1(%arg0: i32, %arg1: i32, %arg2: i32) -> (i32, i32) {
    %c0_i32 = arith.constant 0 : i32
    return %arg2, %arg1 : i32, i32
  }
  func.func @transform_2(%arg0: i32, %arg1: i32, %arg2: i32) -> (i32, i32) {
    %c0_i32 = arith.constant 0 : i32
    %c0_i32_0 = arith.constant 0 : i32
    return %c0_i32, %arg1 : i32, i32
  }
  func.func @transform_3(%arg0: i32, %arg1: i32, %arg2: i32) -> (i32, i32) {
    %c0_i32 = arith.constant 0 : i32
    return %arg0, %arg1 : i32, i32
  }
}

module attributes {stable_mosaic.version = 11 : i64} {
  func.func @_layernorm_kernel(%arg0: i32, %arg1: memref<16x32xf32, #tpu.memory_space<vmem>>, %arg2: memref<1x32xf32, #tpu.memory_space<vmem>>, %arg3: memref<1x32xf32, #tpu.memory_space<vmem>>, %arg4: memref<16x32xbf16, #tpu.memory_space<vmem>>) attributes {dimension_semantics = [#tpu.dimension_semantics<parallel>], iteration_bounds = array<i64: 1>, scalar_prefetch = 0 : i64, scratch_operands = 0 : i64, tpu.core_type = #tpu.core_type<tc>, window_params = [{transform_indices = @transform_0, window_bounds = array<i64: 16, 32>}, {pipeline_mode = #tpu.pipeline_mode<synchronous>, transform_indices = @transform_1, window_bounds = array<i64: 1, 32>}, {pipeline_mode = #tpu.pipeline_mode<synchronous>, transform_indices = @transform_2, window_bounds = array<i64: 1, 32>}, {transform_indices = @transform_3, window_bounds = array<i64: 16, 32>}]} {
    %c0 = arith.constant 0 : index
    %c0_0 = arith.constant 0 : index
    %0 = vector.load %arg1[%c0, %c0_0] : memref<16x32xf32, #tpu.memory_space<vmem>>, vector<16x32xf32>
    %cst = arith.constant dense<0.000000e+00> : vector<16xf32>
    %1 = vector.multi_reduction <add>, %0, %cst [1] : vector<16x32xf32> to vector<16xf32>
    %2 = vector.shape_cast %1 : vector<16xf32> to vector<16x1xf32>
    %cst_1 = arith.constant 3.200000e+01 : f32
    %3 = vector.broadcast %cst_1 : f32 to vector<16x1xf32>
    %4 = arith.divf %2, %3 : vector<16x1xf32>
    %5 = vector.broadcast %4 : vector<16x1xf32> to vector<16x32xf32>
    %6 = arith.subf %0, %5 : vector<16x32xf32>
    %7 = arith.mulf %6, %6 : vector<16x32xf32>
    %cst_2 = arith.constant dense<0.000000e+00> : vector<16xf32>
    %8 = vector.multi_reduction <add>, %7, %cst_2 [1] : vector<16x32xf32> to vector<16xf32>
    %9 = vector.shape_cast %8 : vector<16xf32> to vector<16x1xf32>
    %cst_3 = arith.constant 3.200000e+01 : f32
    %10 = vector.broadcast %cst_3 : f32 to vector<16x1xf32>
    %11 = arith.divf %9, %10 : vector<16x1xf32>
    %cst_4 = arith.constant 9.99999996E-13 : f32
    %12 = vector.broadcast %cst_4 : f32 to vector<16x1xf32>
    %13 = arith.addf %11, %12 : vector<16x1xf32>
    %14 = math.rsqrt %13 : vector<16x1xf32>
    %15 = vector.broadcast %14 : vector<16x1xf32> to vector<16x32xf32>
    %16 = arith.mulf %6, %15 : vector<16x32xf32>
    %c0_5 = arith.constant 0 : index
    %c0_6 = arith.constant 0 : index
    %17 = vector.load %arg2[%c0_5, %c0_6] : memref<1x32xf32, #tpu.memory_space<vmem>>, vector<1x32xf32>
    %18 = vector.broadcast %17 : vector<1x32xf32> to vector<16x32xf32>
    %19 = arith.mulf %16, %18 : vector<16x32xf32>
    %c0_7 = arith.constant 0 : index
    %c0_8 = arith.constant 0 : index
    %20 = vector.load %arg3[%c0_7, %c0_8] : memref<1x32xf32, #tpu.memory_space<vmem>>, vector<1x32xf32>
    %21 = vector.broadcast %20 : vector<1x32xf32> to vector<16x32xf32>
    %22 = arith.addf %19, %21 : vector<16x32xf32>
    %23 = arith.truncf %22 : vector<16x32xf32> to vector<16x32xbf16>
    %c0_9 = arith.constant 0 : index
    %c0_10 = arith.constant 0 : index
    %24 = vector.load %arg4[%c0_9, %c0_10] : memref<16x32xbf16, #tpu.memory_space<vmem>>, vector<16x32xbf16>
    tpu.vector_store %arg4[%c0_9, %c0_10], %23 {strides = array<i32>} : memref<16x32xbf16, #tpu.memory_space<vmem>>, vector<16x32xbf16>,
    return
  }
  func.func @transform_0(%arg0: i32) -> (i32, i32) {
    %c0_i32 = arith.constant 0 : i32
    %c0_i32_0 = arith.constant 0 : i32
    return %arg0, %c0_i32 : i32, i32
  }
  func.func @transform_1(%arg0: i32) -> (i32, i32) {
    %c0_i32 = arith.constant 0 : i32
    %c0_i32_0 = arith.constant 0 : i32
    %c0_i32_1 = arith.constant 0 : i32
    return %c0_i32, %c0_i32_0 : i32, i32
  }
  func.func @transform_2(%arg0: i32) -> (i32, i32) {
    %c0_i32 = arith.constant 0 : i32
    %c0_i32_0 = arith.constant 0 : i32
    %c0_i32_1 = arith.constant 0 : i32
    return %c0_i32, %c0_i32_0 : i32, i32
  }
  func.func @transform_3(%arg0: i32) -> (i32, i32) {
    %c0_i32 = arith.constant 0 : i32
    %c0_i32_0 = arith.constant 0 : i32
    return %arg0, %c0_i32 : i32, i32
  }
}

module attributes {stable_mosaic.version = 11 : i64} {
  func.func @_matmul_res_ln_kernel(%arg0: i32, %arg1: i32, %arg2: memref<16x32xbf16, #tpu.memory_space<vmem>>, %arg3: memref<32x32xbf16, #tpu.memory_space<vmem>>, %arg4: memref<1x32xf32, #tpu.memory_space<vmem>>, %arg5: memref<16x32xbf16, #tpu.memory_space<vmem>>, %arg6: memref<1x32xf32, #tpu.memory_space<vmem>>, %arg7: memref<1x32xf32, #tpu.memory_space<vmem>>, %arg8: memref<16x32xbf16, #tpu.memory_space<vmem>>, %arg9: memref<16x32xf32, #tpu.memory_space<vmem>>) attributes {dimension_semantics = [#tpu.dimension_semantics<parallel>, #tpu.dimension_semantics<arbitrary>], iteration_bounds = array<i64: 1, 1>, scalar_prefetch = 0 : i64, scratch_operands = 1 : i64, tpu.core_type = #tpu.core_type<tc>, window_params = [{transform_indices = @transform_0, window_bounds = array<i64: 16, 32>}, {transform_indices = @transform_1, window_bounds = array<i64: 32, 32>}, {pipeline_mode = #tpu.pipeline_mode<synchronous>, transform_indices = @transform_2, window_bounds = array<i64: 1, 32>}, {transform_indices = @transform_3, window_bounds = array<i64: 16, 32>}, {pipeline_mode = #tpu.pipeline_mode<synchronous>, transform_indices = @transform_4, window_bounds = array<i64: 1, 32>}, {pipeline_mode = #tpu.pipeline_mode<synchronous>, transform_indices = @transform_5, window_bounds = array<i64: 1, 32>}, {transform_indices = @transform_6, window_bounds = array<i64: 16, 32>}]} {
    %c0_i32 = arith.constant 0 : i32
    %0 = arith.cmpi eq, %arg1, %c0_i32 : i32
    %1 = arith.extui %0 : i1 to i32
    %c0_i32_0 = arith.constant 0 : i32
    %2 = arith.cmpi ne, %1, %c0_i32_0 : i32
    scf.if %2 {
      %cst_10 = arith.constant 0.000000e+00 : f32
      %12 = vector.broadcast %cst_10 : f32 to vector<16x32xf32>
      %c0_11 = arith.constant 0 : index
      %c0_12 = arith.constant 0 : index
      %13 = vector.load %arg9[%c0_11, %c0_12] : memref<16x32xf32, #tpu.memory_space<vmem>>, vector<16x32xf32>
      tpu.vector_store %arg9[%c0_11, %c0_12], %12 {strides = array<i32>} : memref<16x32xf32, #tpu.memory_space<vmem>>, vector<16x32xf32>,
    } else {
    }
    %c0 = arith.constant 0 : index
    %c0_1 = arith.constant 0 : index
    %3 = vector.load %arg9[%c0, %c0_1] : memref<16x32xf32, #tpu.memory_space<vmem>>, vector<16x32xf32>
    %c0_2 = arith.constant 0 : index
    %c0_3 = arith.constant 0 : index
    %4 = vector.load %arg2[%c0_2, %c0_3] : memref<16x32xbf16, #tpu.memory_space<vmem>>, vector<16x32xbf16>
    %c0_4 = arith.constant 0 : index
    %c0_5 = arith.constant 0 : index
    %5 = vector.load %arg3[%c0_4, %c0_5] : memref<32x32xbf16, #tpu.memory_space<vmem>>, vector<32x32xbf16>
    %cst = arith.constant dense<0.000000e+00> : vector<16x32xf32>
    %6 = tpu.matmul %4, %5, %cst {dimension_numbers = #tpu.dot_dimension_numbers<[1], [0], [0], [1], [0, 0, 1, 1], [], []>} : vector<16x32xbf16>, vector<32x32xbf16>, vector<16x32xf32> -> vector<16x32xf32>
    %7 = arith.addf %3, %6 : vector<16x32xf32>
    %c0_6 = arith.constant 0 : index
    %c0_7 = arith.constant 0 : index
    %8 = vector.load %arg9[%c0_6, %c0_7] : memref<16x32xf32, #tpu.memory_space<vmem>>, vector<16x32xf32>
    tpu.vector_store %arg9[%c0_6, %c0_7], %7 {strides = array<i32>} : memref<16x32xf32, #tpu.memory_space<vmem>>, vector<16x32xf32>,
    %c0_i32_8 = arith.constant 0 : i32
    %9 = arith.cmpi eq, %arg1, %c0_i32_8 : i32
    %10 = arith.extui %9 : i1 to i32
    %c0_i32_9 = arith.constant 0 : i32
    %11 = arith.cmpi ne, %10, %c0_i32_9 : i32
    scf.if %11 {
      %c0_10 = arith.constant 0 : index
      %c0_11 = arith.constant 0 : index
      %12 = vector.load %arg9[%c0_10, %c0_11] : memref<16x32xf32, #tpu.memory_space<vmem>>, vector<16x32xf32>
      %c0_12 = arith.constant 0 : index
      %c0_13 = arith.constant 0 : index
      %13 = vector.load %arg4[%c0_12, %c0_13] : memref<1x32xf32, #tpu.memory_space<vmem>>, vector<1x32xf32>
      %14 = vector.broadcast %13 : vector<1x32xf32> to vector<16x32xf32>
      %15 = arith.addf %12, %14 : vector<16x32xf32>
      %c0_14 = arith.constant 0 : index
      %c0_15 = arith.constant 0 : index
      %16 = vector.load %arg5[%c0_14, %c0_15] : memref<16x32xbf16, #tpu.memory_space<vmem>>, vector<16x32xbf16>
      %17 = arith.extf %16 : vector<16x32xbf16> to vector<16x32xf32>
      %18 = arith.addf %15, %17 : vector<16x32xf32>
      %cst_16 = arith.constant dense<0.000000e+00> : vector<16xf32>
      %19 = vector.multi_reduction <add>, %18, %cst_16 [1] : vector<16x32xf32> to vector<16xf32>
      %20 = vector.shape_cast %19 : vector<16xf32> to vector<16x1xf32>
      %cst_17 = arith.constant 3.200000e+01 : f32
      %21 = vector.broadcast %cst_17 : f32 to vector<16x1xf32>
      %22 = arith.divf %20, %21 : vector<16x1xf32>
      %23 = vector.broadcast %22 : vector<16x1xf32> to vector<16x32xf32>
      %24 = arith.subf %18, %23 : vector<16x32xf32>
      %25 = arith.mulf %24, %24 : vector<16x32xf32>
      %cst_18 = arith.constant dense<0.000000e+00> : vector<16xf32>
      %26 = vector.multi_reduction <add>, %25, %cst_18 [1] : vector<16x32xf32> to vector<16xf32>
      %27 = vector.shape_cast %26 : vector<16xf32> to vector<16x1xf32>
      %cst_19 = arith.constant 3.200000e+01 : f32
      %28 = vector.broadcast %cst_19 : f32 to vector<16x1xf32>
      %29 = arith.divf %27, %28 : vector<16x1xf32>
      %cst_20 = arith.constant 9.99999996E-13 : f32
      %30 = vector.broadcast %cst_20 : f32 to vector<16x1xf32>
      %31 = arith.addf %29, %30 : vector<16x1xf32>
      %32 = math.rsqrt %31 : vector<16x1xf32>
      %33 = vector.broadcast %32 : vector<16x1xf32> to vector<16x32xf32>
      %34 = arith.mulf %24, %33 : vector<16x32xf32>
      %c0_21 = arith.constant 0 : index
      %c0_22 = arith.constant 0 : index
      %35 = vector.load %arg6[%c0_21, %c0_22] : memref<1x32xf32, #tpu.memory_space<vmem>>, vector<1x32xf32>
      %36 = vector.broadcast %35 : vector<1x32xf32> to vector<16x32xf32>
      %37 = arith.mulf %34, %36 : vector<16x32xf32>
      %c0_23 = arith.constant 0 : index
      %c0_24 = arith.constant 0 : index
      %38 = vector.load %arg7[%c0_23, %c0_24] : memref<1x32xf32, #tpu.memory_space<vmem>>, vector<1x32xf32>
      %39 = vector.broadcast %38 : vector<1x32xf32> to vector<16x32xf32>
      %40 = arith.addf %37, %39 : vector<16x32xf32>
      %41 = arith.truncf %40 : vector<16x32xf32> to vector<16x32xbf16>
      %c0_25 = arith.constant 0 : index
      %c0_26 = arith.constant 0 : index
      %42 = vector.load %arg8[%c0_25, %c0_26] : memref<16x32xbf16, #tpu.memory_space<vmem>>, vector<16x32xbf16>
      tpu.vector_store %arg8[%c0_25, %c0_26], %41 {strides = array<i32>} : memref<16x32xbf16, #tpu.memory_space<vmem>>, vector<16x32xbf16>,
    } else {
    }
    return
  }
  func.func @transform_0(%arg0: i32, %arg1: i32) -> (i32, i32) {
    %c0_i32 = arith.constant 0 : i32
    return %arg0, %arg1 : i32, i32
  }
  func.func @transform_1(%arg0: i32, %arg1: i32) -> (i32, i32) {
    %c0_i32 = arith.constant 0 : i32
    %c0_i32_0 = arith.constant 0 : i32
    return %arg1, %c0_i32 : i32, i32
  }
  func.func @transform_2(%arg0: i32, %arg1: i32) -> (i32, i32) {
    %c0_i32 = arith.constant 0 : i32
    %c0_i32_0 = arith.constant 0 : i32
    %c0_i32_1 = arith.constant 0 : i32
    return %c0_i32, %c0_i32_0 : i32, i32
  }
  func.func @transform_3(%arg0: i32, %arg1: i32) -> (i32, i32) {
    %c0_i32 = arith.constant 0 : i32
    %c0_i32_0 = arith.constant 0 : i32
    return %arg0, %c0_i32 : i32, i32
  }
  func.func @transform_4(%arg0: i32, %arg1: i32) -> (i32, i32) {
    %c0_i32 = arith.constant 0 : i32
    %c0_i32_0 = arith.constant 0 : i32
    %c0_i32_1 = arith.constant 0 : i32
    return %c0_i32, %c0_i32_0 : i32, i32
  }
  func.func @transform_5(%arg0: i32, %arg1: i32) -> (i32, i32) {
    %c0_i32 = arith.constant 0 : i32
    %c0_i32_0 = arith.constant 0 : i32
    %c0_i32_1 = arith.constant 0 : i32
    return %c0_i32, %c0_i32_0 : i32, i32
  }
  func.func @transform_6(%arg0: i32, %arg1: i32) -> (i32, i32) {
    %c0_i32 = arith.constant 0 : i32
    %c0_i32_0 = arith.constant 0 : i32
    return %arg0, %c0_i32 : i32, i32
  }
}

module attributes {stable_mosaic.version = 11 : i64} {
  func.func @_matmul_kernel(%arg0: i32, %arg1: i32, %arg2: i32, %arg3: memref<16x32xbf16, #tpu.memory_space<vmem>>, %arg4: memref<32x64xbf16, #tpu.memory_space<vmem>>, %arg5: memref<1x64xf32, #tpu.memory_space<vmem>>, %arg6: memref<16x64xbf16, #tpu.memory_space<vmem>>, %arg7: memref<16x64xf32, #tpu.memory_space<vmem>>) attributes {dimension_semantics = [#tpu.dimension_semantics<parallel>, #tpu.dimension_semantics<parallel>, #tpu.dimension_semantics<arbitrary>], iteration_bounds = array<i64: 1, 1, 1>, scalar_prefetch = 0 : i64, scratch_operands = 1 : i64, tpu.core_type = #tpu.core_type<tc>, window_params = [{transform_indices = @transform_0, window_bounds = array<i64: 16, 32>}, {transform_indices = @transform_1, window_bounds = array<i64: 32, 64>}, {transform_indices = @transform_2, window_bounds = array<i64: 1, 64>}, {transform_indices = @transform_3, window_bounds = array<i64: 16, 64>}]} {
    %c0_i32 = arith.constant 0 : i32
    %0 = arith.cmpi eq, %arg2, %c0_i32 : i32
    %1 = arith.extui %0 : i1 to i32
    %c0_i32_0 = arith.constant 0 : i32
    %2 = arith.cmpi ne, %1, %c0_i32_0 : i32
    scf.if %2 {
      %cst_10 = arith.constant 0.000000e+00 : f32
      %12 = vector.broadcast %cst_10 : f32 to vector<16x64xf32>
      %c0_11 = arith.constant 0 : index
      %c0_12 = arith.constant 0 : index
      %13 = vector.load %arg7[%c0_11, %c0_12] : memref<16x64xf32, #tpu.memory_space<vmem>>, vector<16x64xf32>
      tpu.vector_store %arg7[%c0_11, %c0_12], %12 {strides = array<i32>} : memref<16x64xf32, #tpu.memory_space<vmem>>, vector<16x64xf32>,
    } else {
    }
    %c0 = arith.constant 0 : index
    %c0_1 = arith.constant 0 : index
    %3 = vector.load %arg7[%c0, %c0_1] : memref<16x64xf32, #tpu.memory_space<vmem>>, vector<16x64xf32>
    %c0_2 = arith.constant 0 : index
    %c0_3 = arith.constant 0 : index
    %4 = vector.load %arg3[%c0_2, %c0_3] : memref<16x32xbf16, #tpu.memory_space<vmem>>, vector<16x32xbf16>
    %c0_4 = arith.constant 0 : index
    %c0_5 = arith.constant 0 : index
    %5 = vector.load %arg4[%c0_4, %c0_5] : memref<32x64xbf16, #tpu.memory_space<vmem>>, vector<32x64xbf16>
    %cst = arith.constant dense<0.000000e+00> : vector<16x64xf32>
    %6 = tpu.matmul %4, %5, %cst {dimension_numbers = #tpu.dot_dimension_numbers<[1], [0], [0], [1], [0, 0, 1, 1], [], []>} : vector<16x32xbf16>, vector<32x64xbf16>, vector<16x64xf32> -> vector<16x64xf32>
    %7 = arith.addf %3, %6 : vector<16x64xf32>
    %c0_6 = arith.constant 0 : index
    %c0_7 = arith.constant 0 : index
    %8 = vector.load %arg7[%c0_6, %c0_7] : memref<16x64xf32, #tpu.memory_space<vmem>>, vector<16x64xf32>
    tpu.vector_store %arg7[%c0_6, %c0_7], %7 {strides = array<i32>} : memref<16x64xf32, #tpu.memory_space<vmem>>, vector<16x64xf32>,
    %c0_i32_8 = arith.constant 0 : i32
    %9 = arith.cmpi eq, %arg2, %c0_i32_8 : i32
    %10 = arith.extui %9 : i1 to i32
    %c0_i32_9 = arith.constant 0 : i32
    %11 = arith.cmpi ne, %10, %c0_i32_9 : i32
    scf.if %11 {
      %c0_10 = arith.constant 0 : index
      %c0_11 = arith.constant 0 : index
      %12 = vector.load %arg7[%c0_10, %c0_11] : memref<16x64xf32, #tpu.memory_space<vmem>>, vector<16x64xf32>
      %c0_12 = arith.constant 0 : index
      %c0_13 = arith.constant 0 : index
      %13 = vector.load %arg5[%c0_12, %c0_13] : memref<1x64xf32, #tpu.memory_space<vmem>>, vector<1x64xf32>
      %14 = vector.broadcast %13 : vector<1x64xf32> to vector<16x64xf32>
      %15 = arith.addf %12, %14 : vector<16x64xf32>
      %cst_14 = arith.constant 5.000000e-01 : f32
      %16 = vector.broadcast %cst_14 : f32 to vector<16x64xf32>
      %17 = arith.mulf %16, %15 : vector<16x64xf32>
      %cst_15 = arith.constant 4.471500e-02 : f32
      %18 = vector.broadcast %cst_15 : f32 to vector<16x64xf32>
      %19 = arith.mulf %18, %15 : vector<16x64xf32>
      %20 = arith.mulf %19, %15 : vector<16x64xf32>
      %21 = arith.mulf %20, %15 : vector<16x64xf32>
      %22 = arith.addf %15, %21 : vector<16x64xf32>
      %cst_16 = arith.constant 0.797884583 : f32
      %23 = vector.broadcast %cst_16 : f32 to vector<16x64xf32>
      %24 = arith.mulf %23, %22 : vector<16x64xf32>
      %25 = math.tanh %24 : vector<16x64xf32>
      %cst_17 = arith.constant 1.000000e+00 : f32
      %26 = vector.broadcast %cst_17 : f32 to vector<16x64xf32>
      %27 = arith.addf %26, %25 : vector<16x64xf32>
      %28 = arith.mulf %17, %27 : vector<16x64xf32>
      %29 = arith.truncf %28 : vector<16x64xf32> to vector<16x64xbf16>
      %c0_18 = arith.constant 0 : index
      %c0_19 = arith.constant 0 : index
      %30 = vector.load %arg6[%c0_18, %c0_19] : memref<16x64xbf16, #tpu.memory_space<vmem>>, vector<16x64xbf16>
      tpu.vector_store %arg6[%c0_18, %c0_19], %29 {strides = array<i32>} : memref<16x64xbf16, #tpu.memory_space<vmem>>, vector<16x64xbf16>,
    } else {
    }
    return
  }
  func.func @transform_0(%arg0: i32, %arg1: i32, %arg2: i32) -> (i32, i32) {
    %c0_i32 = arith.constant 0 : i32
    return %arg0, %arg2 : i32, i32
  }
  func.func @transform_1(%arg0: i32, %arg1: i32, %arg2: i32) -> (i32, i32) {
    %c0_i32 = arith.constant 0 : i32
    return %arg2, %arg1 : i32, i32
  }
  func.func @transform_2(%arg0: i32, %arg1: i32, %arg2: i32) -> (i32, i32) {
    %c0_i32 = arith.constant 0 : i32
    %c0_i32_0 = arith.constant 0 : i32
    return %c0_i32, %arg1 : i32, i32
  }
  func.func @transform_3(%arg0: i32, %arg1: i32, %arg2: i32) -> (i32, i32) {
    %c0_i32 = arith.constant 0 : i32
    return %arg0, %arg1 : i32, i32
  }
}

module attributes {stable_mosaic.version = 11 : i64} {
  func.func @_matmul_kernel(%arg0: i32, %arg1: i32, %arg2: i32, %arg3: memref<2x32xbf16, #tpu.memory_space<vmem>>, %arg4: memref<32x32xbf16, #tpu.memory_space<vmem>>, %arg5: memref<1x32xf32, #tpu.memory_space<vmem>>, %arg6: memref<2x32xbf16, #tpu.memory_space<vmem>>, %arg7: memref<2x32xf32, #tpu.memory_space<vmem>>) attributes {dimension_semantics = [#tpu.dimension_semantics<parallel>, #tpu.dimension_semantics<parallel>, #tpu.dimension_semantics<arbitrary>], iteration_bounds = array<i64: 1, 1, 1>, scalar_prefetch = 0 : i64, scratch_operands = 1 : i64, tpu.core_type = #tpu.core_type<tc>, window_params = [{transform_indices = @transform_0, window_bounds = array<i64: 2, 32>}, {transform_indices = @transform_1, window_bounds = array<i64: 32, 32>}, {transform_indices = @transform_2, window_bounds = array<i64: 1, 32>}, {transform_indices = @transform_3, window_bounds = array<i64: 2, 32>}]} {
    %c0_i32 = arith.constant 0 : i32
    %0 = arith.cmpi eq, %arg2, %c0_i32 : i32
    %1 = arith.extui %0 : i1 to i32
    %c0_i32_0 = arith.constant 0 : i32
    %2 = arith.cmpi ne, %1, %c0_i32_0 : i32
    scf.if %2 {
      %cst_10 = arith.constant 0.000000e+00 : f32
      %12 = vector.broadcast %cst_10 : f32 to vector<2x32xf32>
      %c0_11 = arith.constant 0 : index
      %c0_12 = arith.constant 0 : index
      %13 = vector.load %arg7[%c0_11, %c0_12] : memref<2x32xf32, #tpu.memory_space<vmem>>, vector<2x32xf32>
      tpu.vector_store %arg7[%c0_11, %c0_12], %12 {strides = array<i32>} : memref<2x32xf32, #tpu.memory_space<vmem>>, vector<2x32xf32>,
    } else {
    }
    %c0 = arith.constant 0 : index
    %c0_1 = arith.constant 0 : index
    %3 = vector.load %arg7[%c0, %c0_1] : memref<2x32xf32, #tpu.memory_space<vmem>>, vector<2x32xf32>
    %c0_2 = arith.constant 0 : index
    %c0_3 = arith.constant 0 : index
    %4 = vector.load %arg3[%c0_2, %c0_3] : memref<2x32xbf16, #tpu.memory_space<vmem>>, vector<2x32xbf16>
    %c0_4 = arith.constant 0 : index
    %c0_5 = arith.constant 0 : index
    %5 = vector.load %arg4[%c0_4, %c0_5] : memref<32x32xbf16, #tpu.memory_space<vmem>>, vector<32x32xbf16>
    %cst = arith.constant dense<0.000000e+00> : vector<2x32xf32>
    %6 = tpu.matmul %4, %5, %cst {dimension_numbers = #tpu.dot_dimension_numbers<[1], [0], [0], [1], [0, 0, 1, 1], [], []>} : vector<2x32xbf16>, vector<32x32xbf16>, vector<2x32xf32> -> vector<2x32xf32>
    %7 = arith.addf %3, %6 : vector<2x32xf32>
    %c0_6 = arith.constant 0 : index
    %c0_7 = arith.constant 0 : index
    %8 = vector.load %arg7[%c0_6, %c0_7] : memref<2x32xf32, #tpu.memory_space<vmem>>, vector<2x32xf32>
    tpu.vector_store %arg7[%c0_6, %c0_7], %7 {strides = array<i32>} : memref<2x32xf32, #tpu.memory_space<vmem>>, vector<2x32xf32>,
    %c0_i32_8 = arith.constant 0 : i32
    %9 = arith.cmpi eq, %arg2, %c0_i32_8 : i32
    %10 = arith.extui %9 : i1 to i32
    %c0_i32_9 = arith.constant 0 : i32
    %11 = arith.cmpi ne, %10, %c0_i32_9 : i32
    scf.if %11 {
      %c0_10 = arith.constant 0 : index
      %c0_11 = arith.constant 0 : index
      %12 = vector.load %arg7[%c0_10, %c0_11] : memref<2x32xf32, #tpu.memory_space<vmem>>, vector<2x32xf32>
      %c0_12 = arith.constant 0 : index
      %c0_13 = arith.constant 0 : index
      %13 = vector.load %arg5[%c0_12, %c0_13] : memref<1x32xf32, #tpu.memory_space<vmem>>, vector<1x32xf32>
      %14 = vector.broadcast %13 : vector<1x32xf32> to vector<2x32xf32>
      %15 = arith.addf %12, %14 : vector<2x32xf32>
      %16 = math.tanh %15 : vector<2x32xf32>
      %17 = arith.truncf %16 : vector<2x32xf32> to vector<2x32xbf16>
      %c0_14 = arith.constant 0 : index
      %c0_15 = arith.constant 0 : index
      %18 = vector.load %arg6[%c0_14, %c0_15] : memref<2x32xbf16, #tpu.memory_space<vmem>>, vector<2x32xbf16>
      tpu.vector_store %arg6[%c0_14, %c0_15], %17 {strides = array<i32>} : memref<2x32xbf16, #tpu.memory_space<vmem>>, vector<2x32xbf16>,
    } else {
    }
    return
  }
  func.func @transform_0(%arg0: i32, %arg1: i32, %arg2: i32) -> (i32, i32) {
    %c0_i32 = arith.constant 0 : i32
    return %arg0, %arg2 : i32, i32
  }
  func.func @transform_1(%arg0: i32, %arg1: i32, %arg2: i32) -> (i32, i32) {
    %c0_i32 = arith.constant 0 : i32
    return %arg2, %arg1 : i32, i32
  }
  func.func @transform_2(%arg0: i32, %arg1: i32, %arg2: i32) -> (i32, i32) {
    %c0_i32 = arith.constant 0 : i32
    %c0_i32_0 = arith.constant 0 : i32
    return %c0_i32, %arg1 : i32, i32
  }
  func.func @transform_3(%arg0: i32, %arg1: i32, %arg2: i32) -> (i32, i32) {
    %c0_i32 = arith.constant 0 : i32
    return %arg0, %arg1 : i32, i32
  }
}

module attributes {stable_mosaic.version = 11 : i64} {
  func.func @_matmul_kernel(%arg0: i32, %arg1: i32, %arg2: i32, %arg3: memref<2x32xbf16, #tpu.memory_space<vmem>>, %arg4: memref<32x128xbf16, #tpu.memory_space<vmem>>, %arg5: memref<1x128xf32, #tpu.memory_space<vmem>>, %arg6: memref<2x128xf32, #tpu.memory_space<vmem>>, %arg7: memref<2x128xf32, #tpu.memory_space<vmem>>) attributes {dimension_semantics = [#tpu.dimension_semantics<parallel>, #tpu.dimension_semantics<parallel>, #tpu.dimension_semantics<arbitrary>], iteration_bounds = array<i64: 1, 1, 1>, scalar_prefetch = 0 : i64, scratch_operands = 1 : i64, tpu.core_type = #tpu.core_type<tc>, window_params = [{transform_indices = @transform_0, window_bounds = array<i64: 2, 32>}, {transform_indices = @transform_1, window_bounds = array<i64: 32, 128>}, {transform_indices = @transform_2, window_bounds = array<i64: 1, 128>}, {transform_indices = @transform_3, window_bounds = array<i64: 2, 128>}]} {
    %c0_i32 = arith.constant 0 : i32
    %0 = arith.cmpi eq, %arg2, %c0_i32 : i32
    %1 = arith.extui %0 : i1 to i32
    %c0_i32_0 = arith.constant 0 : i32
    %2 = arith.cmpi ne, %1, %c0_i32_0 : i32
    scf.if %2 {
      %cst_10 = arith.constant 0.000000e+00 : f32
      %12 = vector.broadcast %cst_10 : f32 to vector<2x128xf32>
      %c0_11 = arith.constant 0 : index
      %c0_12 = arith.constant 0 : index
      %13 = vector.load %arg7[%c0_11, %c0_12] : memref<2x128xf32, #tpu.memory_space<vmem>>, vector<2x128xf32>
      tpu.vector_store %arg7[%c0_11, %c0_12], %12 {strides = array<i32>} : memref<2x128xf32, #tpu.memory_space<vmem>>, vector<2x128xf32>,
    } else {
    }
    %c0 = arith.constant 0 : index
    %c0_1 = arith.constant 0 : index
    %3 = vector.load %arg7[%c0, %c0_1] : memref<2x128xf32, #tpu.memory_space<vmem>>, vector<2x128xf32>
    %c0_2 = arith.constant 0 : index
    %c0_3 = arith.constant 0 : index
    %4 = vector.load %arg3[%c0_2, %c0_3] : memref<2x32xbf16, #tpu.memory_space<vmem>>, vector<2x32xbf16>
    %c0_4 = arith.constant 0 : index
    %c0_5 = arith.constant 0 : index
    %5 = vector.load %arg4[%c0_4, %c0_5] : memref<32x128xbf16, #tpu.memory_space<vmem>>, vector<32x128xbf16>
    %cst = arith.constant dense<0.000000e+00> : vector<2x128xf32>
    %6 = tpu.matmul %4, %5, %cst {dimension_numbers = #tpu.dot_dimension_numbers<[1], [0], [0], [1], [0, 0, 1, 1], [], []>} : vector<2x32xbf16>, vector<32x128xbf16>, vector<2x128xf32> -> vector<2x128xf32>
    %7 = arith.addf %3, %6 : vector<2x128xf32>
    %c0_6 = arith.constant 0 : index
    %c0_7 = arith.constant 0 : index
    %8 = vector.load %arg7[%c0_6, %c0_7] : memref<2x128xf32, #tpu.memory_space<vmem>>, vector<2x128xf32>
    tpu.vector_store %arg7[%c0_6, %c0_7], %7 {strides = array<i32>} : memref<2x128xf32, #tpu.memory_space<vmem>>, vector<2x128xf32>,
    %c0_i32_8 = arith.constant 0 : i32
    %9 = arith.cmpi eq, %arg2, %c0_i32_8 : i32
    %10 = arith.extui %9 : i1 to i32
    %c0_i32_9 = arith.constant 0 : i32
    %11 = arith.cmpi ne, %10, %c0_i32_9 : i32
    scf.if %11 {
      %c0_10 = arith.constant 0 : index
      %c0_11 = arith.constant 0 : index
      %12 = vector.load %arg7[%c0_10, %c0_11] : memref<2x128xf32, #tpu.memory_space<vmem>>, vector<2x128xf32>
      %c0_12 = arith.constant 0 : index
      %c0_13 = arith.constant 0 : index
      %13 = vector.load %arg5[%c0_12, %c0_13] : memref<1x128xf32, #tpu.memory_space<vmem>>, vector<1x128xf32>
      %14 = vector.broadcast %13 : vector<1x128xf32> to vector<2x128xf32>
      %15 = arith.addf %12, %14 : vector<2x128xf32>
      %c0_14 = arith.constant 0 : index
      %c0_15 = arith.constant 0 : index
      %16 = vector.load %arg6[%c0_14, %c0_15] : memref<2x128xf32, #tpu.memory_space<vmem>>, vector<2x128xf32>
      tpu.vector_store %arg6[%c0_14, %c0_15], %15 {strides = array<i32>} : memref<2x128xf32, #tpu.memory_space<vmem>>, vector<2x128xf32>,
    } else {
    }
    return
  }
  func.func @transform_0(%arg0: i32, %arg1: i32, %arg2: i32) -> (i32, i32) {
    %c0_i32 = arith.constant 0 : i32
    return %arg0, %arg2 : i32, i32
  }
  func.func @transform_1(%arg0: i32, %arg1: i32, %arg2: i32) -> (i32, i32) {
    %c0_i32 = arith.constant 0 : i32
    return %arg2, %arg1 : i32, i32
  }
  func.func @transform_2(%arg0: i32, %arg1: i32, %arg2: i32) -> (i32, i32) {
    %c0_i32 = arith.constant 0 : i32
    %c0_i32_0 = arith.constant 0 : i32
    return %c0_i32, %arg1 : i32, i32
  }
  func.func @transform_3(%arg0: i32, %arg1: i32, %arg2: i32) -> (i32, i32) {
    %c0_i32 = arith.constant 0 : i32
    return %arg0, %arg1 : i32, i32
  }
}

module attributes {stable_mosaic.version = 11 : i64} {
  func.func @_matmul_res_ln_kernel(%arg0: i32, %arg1: i32, %arg2: memref<16x64xbf16, #tpu.memory_space<vmem>>, %arg3: memref<64x32xbf16, #tpu.memory_space<vmem>>, %arg4: memref<1x32xf32, #tpu.memory_space<vmem>>, %arg5: memref<16x32xbf16, #tpu.memory_space<vmem>>, %arg6: memref<1x32xf32, #tpu.memory_space<vmem>>, %arg7: memref<1x32xf32, #tpu.memory_space<vmem>>, %arg8: memref<16x32xbf16, #tpu.memory_space<vmem>>, %arg9: memref<16x32xf32, #tpu.memory_space<vmem>>) attributes {dimension_semantics = [#tpu.dimension_semantics<parallel>, #tpu.dimension_semantics<arbitrary>], iteration_bounds = array<i64: 1, 1>, scalar_prefetch = 0 : i64, scratch_operands = 1 : i64, tpu.core_type = #tpu.core_type<tc>, window_params = [{transform_indices = @transform_0, window_bounds = array<i64: 16, 64>}, {transform_indices = @transform_1, window_bounds = array<i64: 64, 32>}, {pipeline_mode = #tpu.pipeline_mode<synchronous>, transform_indices = @transform_2, window_bounds = array<i64: 1, 32>}, {transform_indices = @transform_3, window_bounds = array<i64: 16, 32>}, {pipeline_mode = #tpu.pipeline_mode<synchronous>, transform_indices = @transform_4, window_bounds = array<i64: 1, 32>}, {pipeline_mode = #tpu.pipeline_mode<synchronous>, transform_indices = @transform_5, window_bounds = array<i64: 1, 32>}, {transform_indices = @transform_6, window_bounds = array<i64: 16, 32>}]} {
    %c0_i32 = arith.constant 0 : i32
    %0 = arith.cmpi eq, %arg1, %c0_i32 : i32
    %1 = arith.extui %0 : i1 to i32
    %c0_i32_0 = arith.constant 0 : i32
    %2 = arith.cmpi ne, %1, %c0_i32_0 : i32
    scf.if %2 {
      %cst_10 = arith.constant 0.000000e+00 : f32
      %12 = vector.broadcast %cst_10 : f32 to vector<16x32xf32>
      %c0_11 = arith.constant 0 : index
      %c0_12 = arith.constant 0 : index
      %13 = vector.load %arg9[%c0_11, %c0_12] : memref<16x32xf32, #tpu.memory_space<vmem>>, vector<16x32xf32>
      tpu.vector_store %arg9[%c0_11, %c0_12], %12 {strides = array<i32>} : memref<16x32xf32, #tpu.memory_space<vmem>>, vector<16x32xf32>,
    } else {
    }
    %c0 = arith.constant 0 : index
    %c0_1 = arith.constant 0 : index
    %3 = vector.load %arg9[%c0, %c0_1] : memref<16x32xf32, #tpu.memory_space<vmem>>, vector<16x32xf32>
    %c0_2 = arith.constant 0 : index
    %c0_3 = arith.constant 0 : index
    %4 = vector.load %arg2[%c0_2, %c0_3] : memref<16x64xbf16, #tpu.memory_space<vmem>>, vector<16x64xbf16>
    %c0_4 = arith.constant 0 : index
    %c0_5 = arith.constant 0 : index
    %5 = vector.load %arg3[%c0_4, %c0_5] : memref<64x32xbf16, #tpu.memory_space<vmem>>, vector<64x32xbf16>
    %cst = arith.constant dense<0.000000e+00> : vector<16x32xf32>
    %6 = tpu.matmul %4, %5, %cst {dimension_numbers = #tpu.dot_dimension_numbers<[1], [0], [0], [1], [0, 0, 1, 1], [], []>} : vector<16x64xbf16>, vector<64x32xbf16>, vector<16x32xf32> -> vector<16x32xf32>
    %7 = arith.addf %3, %6 : vector<16x32xf32>
    %c0_6 = arith.constant 0 : index
    %c0_7 = arith.constant 0 : index
    %8 = vector.load %arg9[%c0_6, %c0_7] : memref<16x32xf32, #tpu.memory_space<vmem>>, vector<16x32xf32>
    tpu.vector_store %arg9[%c0_6, %c0_7], %7 {strides = array<i32>} : memref<16x32xf32, #tpu.memory_space<vmem>>, vector<16x32xf32>,
    %c0_i32_8 = arith.constant 0 : i32
    %9 = arith.cmpi eq, %arg1, %c0_i32_8 : i32
    %10 = arith.extui %9 : i1 to i32
    %c0_i32_9 = arith.constant 0 : i32
    %11 = arith.cmpi ne, %10, %c0_i32_9 : i32
    scf.if %11 {
      %c0_10 = arith.constant 0 : index
      %c0_11 = arith.constant 0 : index
      %12 = vector.load %arg9[%c0_10, %c0_11] : memref<16x32xf32, #tpu.memory_space<vmem>>, vector<16x32xf32>
      %c0_12 = arith.constant 0 : index
      %c0_13 = arith.constant 0 : index
      %13 = vector.load %arg4[%c0_12, %c0_13] : memref<1x32xf32, #tpu.memory_space<vmem>>, vector<1x32xf32>
      %14 = vector.broadcast %13 : vector<1x32xf32> to vector<16x32xf32>
      %15 = arith.addf %12, %14 : vector<16x32xf32>
      %c0_14 = arith.constant 0 : index
      %c0_15 = arith.constant 0 : index
      %16 = vector.load %arg5[%c0_14, %c0_15] : memref<16x32xbf16, #tpu.memory_space<vmem>>, vector<16x32xbf16>
      %17 = arith.extf %16 : vector<16x32xbf16> to vector<16x32xf32>
      %18 = arith.addf %15, %17 : vector<16x32xf32>
      %cst_16 = arith.constant dense<0.000000e+00> : vector<16xf32>
      %19 = vector.multi_reduction <add>, %18, %cst_16 [1] : vector<16x32xf32> to vector<16xf32>
      %20 = vector.shape_cast %19 : vector<16xf32> to vector<16x1xf32>
      %cst_17 = arith.constant 3.200000e+01 : f32
      %21 = vector.broadcast %cst_17 : f32 to vector<16x1xf32>
      %22 = arith.divf %20, %21 : vector<16x1xf32>
      %23 = vector.broadcast %22 : vector<16x1xf32> to vector<16x32xf32>
      %24 = arith.subf %18, %23 : vector<16x32xf32>
      %25 = arith.mulf %24, %24 : vector<16x32xf32>
      %cst_18 = arith.constant dense<0.000000e+00> : vector<16xf32>
      %26 = vector.multi_reduction <add>, %25, %cst_18 [1] : vector<16x32xf32> to vector<16xf32>
      %27 = vector.shape_cast %26 : vector<16xf32> to vector<16x1xf32>
      %cst_19 = arith.constant 3.200000e+01 : f32
      %28 = vector.broadcast %cst_19 : f32 to vector<16x1xf32>
      %29 = arith.divf %27, %28 : vector<16x1xf32>
      %cst_20 = arith.constant 9.99999996E-13 : f32
      %30 = vector.broadcast %cst_20 : f32 to vector<16x1xf32>
      %31 = arith.addf %29, %30 : vector<16x1xf32>
      %32 = math.rsqrt %31 : vector<16x1xf32>
      %33 = vector.broadcast %32 : vector<16x1xf32> to vector<16x32xf32>
      %34 = arith.mulf %24, %33 : vector<16x32xf32>
      %c0_21 = arith.constant 0 : index
      %c0_22 = arith.constant 0 : index
      %35 = vector.load %arg6[%c0_21, %c0_22] : memref<1x32xf32, #tpu.memory_space<vmem>>, vector<1x32xf32>
      %36 = vector.broadcast %35 : vector<1x32xf32> to vector<16x32xf32>
      %37 = arith.mulf %34, %36 : vector<16x32xf32>
      %c0_23 = arith.constant 0 : index
      %c0_24 = arith.constant 0 : index
      %38 = vector.load %arg7[%c0_23, %c0_24] : memref<1x32xf32, #tpu.memory_space<vmem>>, vector<1x32xf32>
      %39 = vector.broadcast %38 : vector<1x32xf32> to vector<16x32xf32>
      %40 = arith.addf %37, %39 : vector<16x32xf32>
      %41 = arith.truncf %40 : vector<16x32xf32> to vector<16x32xbf16>
      %c0_25 = arith.constant 0 : index
      %c0_26 = arith.constant 0 : index
      %42 = vector.load %arg8[%c0_25, %c0_26] : memref<16x32xbf16, #tpu.memory_space<vmem>>, vector<16x32xbf16>
      tpu.vector_store %arg8[%c0_25, %c0_26], %41 {strides = array<i32>} : memref<16x32xbf16, #tpu.memory_space<vmem>>, vector<16x32xbf16>,
    } else {
    }
    return
  }
  func.func @transform_0(%arg0: i32, %arg1: i32) -> (i32, i32) {
    %c0_i32 = arith.constant 0 : i32
    return %arg0, %arg1 : i32, i32
  }
  func.func @transform_1(%arg0: i32, %arg1: i32) -> (i32, i32) {
    %c0_i32 = arith.constant 0 : i32
    %c0_i32_0 = arith.constant 0 : i32
    return %arg1, %c0_i32 : i32, i32
  }
  func.func @transform_2(%arg0: i32, %arg1: i32) -> (i32, i32) {
    %c0_i32 = arith.constant 0 : i32
    %c0_i32_0 = arith.constant 0 : i32
    %c0_i32_1 = arith.constant 0 : i32
    return %c0_i32, %c0_i32_0 : i32, i32
  }
  func.func @transform_3(%arg0: i32, %arg1: i32) -> (i32, i32) {
    %c0_i32 = arith.constant 0 : i32
    %c0_i32_0 = arith.constant 0 : i32
    return %arg0, %c0_i32 : i32, i32
  }
  func.func @transform_4(%arg0: i32, %arg1: i32) -> (i32, i32) {
    %c0_i32 = arith.constant 0 : i32
    %c0_i32_0 = arith.constant 0 : i32
    %c0_i32_1 = arith.constant 0 : i32
    return %c0_i32, %c0_i32_0 : i32, i32
  }
  func.func @transform_5(%arg0: i32, %arg1: i32) -> (i32, i32) {
    %c0_i32 = arith.constant 0 : i32
    %c0_i32_0 = arith.constant 0 : i32
    %c0_i32_1 = arith.constant 0 : i32
    return %c0_i32, %c0_i32_0 : i32, i32
  }
  func.func @transform_6(%arg0: i32, %arg1: i32) -> (i32, i32) {
    %c0_i32 = arith.constant 0 : i32
    %c0_i32_0 = arith.constant 0 : i32
    return %arg0, %c0_i32 : i32, i32
  }
}

module attributes {stable_mosaic.version = 11 : i64} {
  func.func @_matmul_kernel(%arg0: i32, %arg1: i32, %arg2: i32, %arg3: memref<16x32xbf16, #tpu.memory_space<vmem>>, %arg4: memref<32x128xbf16, #tpu.memory_space<vmem>>, %arg5: memref<1x128xf32, #tpu.memory_space<vmem>>, %arg6: memref<16x128xf32, #tpu.memory_space<vmem>>, %arg7: memref<16x128xf32, #tpu.memory_space<vmem>>) attributes {dimension_semantics = [#tpu.dimension_semantics<parallel>, #tpu.dimension_semantics<parallel>, #tpu.dimension_semantics<arbitrary>], iteration_bounds = array<i64: 1, 1, 1>, scalar_prefetch = 0 : i64, scratch_operands = 1 : i64, tpu.core_type = #tpu.core_type<tc>, window_params = [{transform_indices = @transform_0, window_bounds = array<i64: 16, 32>}, {transform_indices = @transform_1, window_bounds = array<i64: 32, 128>}, {transform_indices = @transform_2, window_bounds = array<i64: 1, 128>}, {transform_indices = @transform_3, window_bounds = array<i64: 16, 128>}]} {
    %c0_i32 = arith.constant 0 : i32
    %0 = arith.cmpi eq, %arg2, %c0_i32 : i32
    %1 = arith.extui %0 : i1 to i32
    %c0_i32_0 = arith.constant 0 : i32
    %2 = arith.cmpi ne, %1, %c0_i32_0 : i32
    scf.if %2 {
      %cst_10 = arith.constant 0.000000e+00 : f32
      %12 = vector.broadcast %cst_10 : f32 to vector<16x128xf32>
      %c0_11 = arith.constant 0 : index
      %c0_12 = arith.constant 0 : index
      %13 = vector.load %arg7[%c0_11, %c0_12] : memref<16x128xf32, #tpu.memory_space<vmem>>, vector<16x128xf32>
      tpu.vector_store %arg7[%c0_11, %c0_12], %12 {strides = array<i32>} : memref<16x128xf32, #tpu.memory_space<vmem>>, vector<16x128xf32>,
    } else {
    }
    %c0 = arith.constant 0 : index
    %c0_1 = arith.constant 0 : index
    %3 = vector.load %arg7[%c0, %c0_1] : memref<16x128xf32, #tpu.memory_space<vmem>>, vector<16x128xf32>
    %c0_2 = arith.constant 0 : index
    %c0_3 = arith.constant 0 : index
    %4 = vector.load %arg3[%c0_2, %c0_3] : memref<16x32xbf16, #tpu.memory_space<vmem>>, vector<16x32xbf16>
    %c0_4 = arith.constant 0 : index
    %c0_5 = arith.constant 0 : index
    %5 = vector.load %arg4[%c0_4, %c0_5] : memref<32x128xbf16, #tpu.memory_space<vmem>>, vector<32x128xbf16>
    %cst = arith.constant dense<0.000000e+00> : vector<16x128xf32>
    %6 = tpu.matmul %4, %5, %cst {dimension_numbers = #tpu.dot_dimension_numbers<[1], [0], [0], [1], [0, 0, 1, 1], [], []>} : vector<16x32xbf16>, vector<32x128xbf16>, vector<16x128xf32> -> vector<16x128xf32>
    %7 = arith.addf %3, %6 : vector<16x128xf32>
    %c0_6 = arith.constant 0 : index
    %c0_7 = arith.constant 0 : index
    %8 = vector.load %arg7[%c0_6, %c0_7] : memref<16x128xf32, #tpu.memory_space<vmem>>, vector<16x128xf32>
    tpu.vector_store %arg7[%c0_6, %c0_7], %7 {strides = array<i32>} : memref<16x128xf32, #tpu.memory_space<vmem>>, vector<16x128xf32>,
    %c0_i32_8 = arith.constant 0 : i32
    %9 = arith.cmpi eq, %arg2, %c0_i32_8 : i32
    %10 = arith.extui %9 : i1 to i32
    %c0_i32_9 = arith.constant 0 : i32
    %11 = arith.cmpi ne, %10, %c0_i32_9 : i32
    scf.if %11 {
      %c0_10 = arith.constant 0 : index
      %c0_11 = arith.constant 0 : index
      %12 = vector.load %arg7[%c0_10, %c0_11] : memref<16x128xf32, #tpu.memory_space<vmem>>, vector<16x128xf32>
      %c0_12 = arith.constant 0 : index
      %c0_13 = arith.constant 0 : index
      %13 = vector.load %arg5[%c0_12, %c0_13] : memref<1x128xf32, #tpu.memory_space<vmem>>, vector<1x128xf32>
      %14 = vector.broadcast %13 : vector<1x128xf32> to vector<16x128xf32>
      %15 = arith.addf %12, %14 : vector<16x128xf32>
      %c0_14 = arith.constant 0 : index
      %c0_15 = arith.constant 0 : index
      %16 = vector.load %arg6[%c0_14, %c0_15] : memref<16x128xf32, #tpu.memory_space<vmem>>, vector<16x128xf32>
      tpu.vector_store %arg6[%c0_14, %c0_15], %15 {strides = array<i32>} : memref<16x128xf32, #tpu.memory_space<vmem>>, vector<16x128xf32>,
    } else {
    }
    return
  }
  func.func @transform_0(%arg0: i32, %arg1: i32, %arg2: i32) -> (i32, i32) {
    %c0_i32 = arith.constant 0 : i32
    return %arg0, %arg2 : i32, i32
  }
  func.func @transform_1(%arg0: i32, %arg1: i32, %arg2: i32) -> (i32, i32) {
    %c0_i32 = arith.constant 0 : i32
    return %arg2, %arg1 : i32, i32
  }
  func.func @transform_2(%arg0: i32, %arg1: i32, %arg2: i32) -> (i32, i32) {
    %c0_i32 = arith.constant 0 : i32
    %c0_i32_0 = arith.constant 0 : i32
    return %c0_i32, %arg1 : i32, i32
  }
  func.func @transform_3(%arg0: i32, %arg1: i32, %arg2: i32) -> (i32, i32) {
    %c0_i32 = arith.constant 0 : i32
    return %arg0, %arg1 : i32, i32
  }
}

</mosaic_0001>

<llo_original>
// kernel: joint_bert_forward.14
$region0: #{joint_bert_forward.14}
  #allocation0 [shape = 'u32[]', space=smem, size = 0x4, offset = 0x4, fixed_abs, tag = 'smem constant byte address 0x4 - core index']
  #allocation1 [shape = 'u32[72,128]{1,0:T(1,128)}', space=vmem, size = 0x9000, scoped, tag = 'internal scratch']
  %s0 = inlined_call_operand.vmem [shape: f32[16,32], index: 0, kind: input, shape index: {}]
  %s1 = inlined_call_operand.vmem [shape: f32[1,32], index: 1, kind: input, shape index: {}]
  %s2 = inlined_call_operand.vmem [shape: f32[1,32], index: 2, kind: input, shape index: {}]
  %s3 = inlined_call_operand.vmem [shape: bf16[16,32], index: 3, kind: output, shape index: {}]
  %s4 = sld [smem:[#allocation0]]
  $region22: #{joint_bert_forward.14} parent=0
    _
  %s6 = ssub.s32 1, %s4
  %s7 = scalar_select 0, %s6, %s4
  // Predicated region
  $region2: #{joint_bert_forward.14} parent=0 // pred_check
    _
  $region3: #{joint_bert_forward.14} parent=0 // pred_check_branch
    %9 = sbr.rel (0) target = $region5
  $region4: #{joint_bert_forward.14} parent=0 // pred_region
    _
  $region5: #{joint_bert_forward.14} parent=0 // pred_fallthru
    _
  // Predicated region
  $region6: #{joint_bert_forward.14} parent=0 // pred_check
    _
  $region7: #{joint_bert_forward.14} parent=0 // pred_check_branch
    %11 = sbr.rel (0) target = $region9
  $region8: #{joint_bert_forward.14} parent=0 // pred_region
    _
  $region9: #{joint_bert_forward.14} parent=0 // pred_fallthru
    _
  // Predicated region
  $region10: #{joint_bert_forward.14} parent=0 // pred_check
    _
  $region11: #{joint_bert_forward.14} parent=0 // pred_check_branch
    %13 = sbr.rel (0) target = $region13
  $region12: #{joint_bert_forward.14} parent=0 // pred_region
    _
  $region13: #{joint_bert_forward.14} parent=0 // pred_fallthru
    _
  %v14 = vld [vmem:[%s0] sm:$0xff]
  %v15 = vld [vmem:[%s0 + $0x8] sm:$0xff]
  %vm16 = vcmask 261120
  %v17 = vsel %vm16, %v14, 0.0
  %18 = vadd.xlane.f32.xlu0 %v17
  %v19 = vpop.xlane.xlu0 %18
  %v20 = vsel %vm16, %v15, 0.0
  %21 = vadd.xlane.f32.xlu0 %v20
  %v22 = vpop.xlane.xlu0 %21
  %v23 = vrcp.pop 32.0
  %v24 = vmul.f32 32.0, %v23
  %v25 = vsub.f32 1.0, %v24
  %v26 = vmul.f32 %v23, %v25
  %v27 = vadd.f32 %v23, %v26
  %vm28 = vweird.f32 %v23
  %v29 = vsel %vm28, %v23, %v27
  %v30 = vmul.f32 %v19, %v29
  %v31 = vmul.f32 %v22, %v29
  %v32 = vsub.f32 %v14, %v30
  %v33 = vsub.f32 %v15, %v31
  %v34 = vmul.f32 %v32, %v32
  %v35 = vmul.f32 %v33, %v33
  %v36 = vsel %vm16, %v34, 0.0
  %37 = vadd.xlane.f32.xlu0 %v36
  %v38 = vpop.xlane.xlu0 %37
  %v39 = vsel %vm16, %v35, 0.0
  %40 = vadd.xlane.f32.xlu0 %v39
  %v41 = vpop.xlane.xlu0 %40
  %v42 = vmul.f32 %v38, %v29
  %v43 = vmul.f32 %v41, %v29
  %v44 = vadd.f32 %v42, 1e-12
  %v45 = vadd.f32 %v43, 1e-12
  %v46 = vrsqrt.pop %v44
  %v47 = vmul.f32 %v46, %v44
  %v48 = vmul.f32 %v47, %v46
  %v49 = vmul.f32 0.5, %v48
  %v50 = vsub.f32 1.5, %v49
  %v51 = vmul.f32 %v46, %v50
  %vm52 = vweird.f32 %v44
  %vm53 = vweird.f32 %v46
  %vm54 = vmor %vm52, %vm53
  %v55 = vsel %vm54, %v46, %v51
  %v56 = vrsqrt.pop %v45
  %v57 = vmul.f32 %v56, %v45
  %v58 = vmul.f32 %v57, %v56
  %v59 = vmul.f32 0.5, %v58
  %v60 = vsub.f32 1.5, %v59
  %v61 = vmul.f32 %v56, %v60
  %vm62 = vweird.f32 %v45
  %vm63 = vweird.f32 %v56
  %vm64 = vmor %vm62, %vm63
  %v65 = vsel %vm64, %v56, %v61
  %v66 = vmul.f32 %v32, %v55
  %v67 = vmul.f32 %v33, %v65
  %v68 = vld [vmem:[%s1] sm:$0x1]
  %v70 = vperm.slane %v68, 0
  %v72 = vmul.f32 %v66, %v70
  %v73 = vmul.f32 %v67, %v70
  %v74 = vld [vmem:[%s2] sm:$0x1]
  %v76 = vperm.slane %v74, 0
  %v78 = vadd.f32 %v72, %v76
  %v79 = vadd.f32 %v73, %v76
  %v80 = vpack.c.bf16 %v78, %v78
  %v81 = vpack.c.bf16 %v79, %v79
  %vm82 = vcmask 257024
  %83 = vst.msk [vmem:[%s3] sm:$0xf] %vm82, %v80
  %84 = vst.msk [vmem:[%s3 + $0x4] sm:$0xf] %vm82, %v81
  // Predicated region
  $region14: #{joint_bert_forward.14} parent=0 // pred_check
    _
  $region15: #{joint_bert_forward.14} parent=0 // pred_check_branch
    %86 = sbr.rel (0) target = $region17
  $region16: #{joint_bert_forward.14} parent=0 // pred_region
    _
  $region17: #{joint_bert_forward.14} parent=0 // pred_fallthru
    _
  // Predicated region
  $region18: #{joint_bert_forward.14} parent=0 // pred_check
    _
  $region19: #{joint_bert_forward.14} parent=0 // pred_check_branch
    %88 = sbr.rel (0) target = $region21
  $region20: #{joint_bert_forward.14} parent=0 // pred_region
    _
  $region21: #{joint_bert_forward.14} parent=0 // pred_fallthru
    _

// kernel: joint_bert_forward.15
$region0: #{joint_bert_forward.15}
  #allocation0 [shape = 'u32[]', space=smem, size = 0x4, offset = 0x4, fixed_abs, tag = 'smem constant byte address 0x4 - core index']
  #allocation1 [shape = 'u32[72,128]{1,0:T(1,128)}', space=vmem, size = 0x9000, scoped, tag = 'internal scratch']
  #allocation2 [shape = 'f32[16,96]{1,0:T(8,128)}', space=vmem, size = 0x2000, scoped, tag = 'scratch operand']
  %s0 = inlined_call_operand.vmem [shape: bf16[16,32], index: 0, kind: input, shape index: {}]
  %s1 = inlined_call_operand.vmem [shape: bf16[32,96], index: 1, kind: input, shape index: {}]
  %s2 = inlined_call_operand.vmem [shape: f32[1,96], index: 2, kind: input, shape index: {}]
  %s3 = inlined_call_operand.vmem [shape: bf16[16,96], index: 3, kind: output, shape index: {}]
  %s4 = sld [smem:[#allocation0]]
  $region30: #{joint_bert_forward.15} parent=0
    _
  %s6 = ssub.s32 1, %s4
  %s7 = scalar_select 0, %s6, %s4
  // Predicated region
  $region2: #{joint_bert_forward.15} parent=0 // pred_check
    _
  $region3: #{joint_bert_forward.15} parent=0 // pred_check_branch
    %9 = sbr.rel (0) target = $region5
  $region4: #{joint_bert_forward.15} parent=0 // pred_region
    _
  $region5: #{joint_bert_forward.15} parent=0 // pred_fallthru
    _
  // Predicated region
  $region6: #{joint_bert_forward.15} parent=0 // pred_check
    _
  $region7: #{joint_bert_forward.15} parent=0 // pred_check_branch
    %11 = sbr.rel (0) target = $region9
  $region8: #{joint_bert_forward.15} parent=0 // pred_region
    _
  $region9: #{joint_bert_forward.15} parent=0 // pred_fallthru
    _
  // Predicated region
  $region10: #{joint_bert_forward.15} parent=0 // pred_check
    _
  $region11: #{joint_bert_forward.15} parent=0 // pred_check_branch
    %13 = sbr.rel (0) target = $region13
  $region12: #{joint_bert_forward.15} parent=0 // pred_region
    _
  $region13: #{joint_bert_forward.15} parent=0 // pred_fallthru
    _
  %p15 = scmp.eq.s32.totalorder 0, 0
  // Predicated region
  $region14: #{joint_bert_forward.15} parent=0 // pred_check
    %p16 = pneg %p15
  $region15: #{joint_bert_forward.15} parent=0 // pred_check_branch
    %18 = sbr.rel (%p16) target = $region17
  $region16: #{joint_bert_forward.15} parent=0 // pred_region
    %vm19 = vcmask 785408
    %20 = vst.msk [vmem:[#allocation2] sm:$0xff] %vm19, 0.0
    %21 = vst.msk [vmem:[#allocation2 + $0x8] sm:$0xff] %vm19, 0.0
  $region17: #{joint_bert_forward.15} parent=0 // pred_fallthru
    _
  %v22 = vld [vmem:[#allocation2] sm:$0xff]
  %v23 = vld [vmem:[#allocation2 + $0x8] sm:$0xff]
  %v24 = vld [vmem:[%s0] sm:$0xf]
  %v25 = vld [vmem:[%s0 + $0x4] sm:$0xf]
  %v26 = vld [vmem:[%s1] sm:$0xf]
  %v27 = vld [vmem:[%s1 + $0x4] sm:$0xf]
  %v28 = vld [vmem:[%s1 + $0x8] sm:$0xf]
  %v29 = vld [vmem:[%s1 + $0xc] sm:$0xf]
  %v32 = vunpack.c.l.b16 %v24
  %v33 = vunpack.c.l.b16 %v25
  %v34 = vpack.c.b16 %v33, %v32
  %v39 = vunpack.c.l.b16 %v26
  %v40 = vunpack.c.l.b16 %v27
  %v41 = vunpack.c.l.b16 %v28
  %v42 = vunpack.c.l.b16 %v29
  %v43 = vpack.c.b16 %v40, %v39
  %v44 = vpack.c.b16 %v42, %v41
  %vm47 = vcmask 261120
  %v49 = vsel %vm47, %v34, 0
  %51 = vmatpush.bf16.msra.mxu0 0
  %52 = vmatpush.bf16.msra.mxu0 0
  %53 = vmatpush.bf16.msra.mxu0 0
  %54 = vmatpush.bf16.msra.mxu0 0
  %55 = vmatpush.bf16.msra.mxu0 0
  %56 = vmatpush.bf16.msra.mxu0 0
  %57 = vmatpush.bf16.msra.mxu0 %v44
  %58 = vmatpush.bf16.msra.mxu0 %v43
  %59 = vmatmul.bf16.gmra.mxu0 %v49
  %v60 = vpop.f32.mrf.mxu0
  %v61 = vadd.f32 0.0, %v60
  %v62 = vpop.f32.mrf.mxu0
  %v63 = vadd.f32 0.0, %v62
  %64 = vdwg.mxu0
  %v65 = vadd.f32 %v22, %v61
  %v66 = vadd.f32 %v23, %v63
  %vm67 = vcmask 785408
  %68 = vst.msk [vmem:[#allocation2] sm:$0xff] %vm67, %v65
  %69 = vst.msk [vmem:[#allocation2 + $0x8] sm:$0xff] %vm67, %v66
  // Predicated region
  $region18: #{joint_bert_forward.15} parent=0 // pred_check
    %p70 = pneg %p15
  $region19: #{joint_bert_forward.15} parent=0 // pred_check_branch
    %72 = sbr.rel (%p70) target = $region21
  $region20: #{joint_bert_forward.15} parent=0 // pred_region
    %v73 = vld [vmem:[#allocation2] sm:$0xff]
    %v74 = vld [vmem:[#allocation2 + $0x8] sm:$0xff]
    %v75 = vld [vmem:[%s2] sm:$0x1]
    %v77 = vperm.slane %v75, 0
    %v79 = vadd.f32 %v73, %v77
    %v80 = vadd.f32 %v74, %v77
    %v81 = vpack.c.bf16 %v79, %v79
    %v82 = vpack.c.bf16 %v80, %v80
    %vm83 = vcmask 781312
    %84 = vst.msk [vmem:[%s3] sm:$0xf] %vm83, %v81
    %85 = vst.msk [vmem:[%s3 + $0x4] sm:$0xf] %vm83, %v82
  $region21: #{joint_bert_forward.15} parent=0 // pred_fallthru
    _
  // Predicated region
  $region22: #{joint_bert_forward.15} parent=0 // pred_check
    _
  $region23: #{joint_bert_forward.15} parent=0 // pred_check_branch
    %87 = sbr.rel (0) target = $region25
  $region24: #{joint_bert_forward.15} parent=0 // pred_region
    _
  $region25: #{joint_bert_forward.15} parent=0 // pred_fallthru
    _
  // Predicated region
  $region26: #{joint_bert_forward.15} parent=0 // pred_check
    _
  $region27: #{joint_bert_forward.15} parent=0 // pred_check_branch
    %89 = sbr.rel (0) target = $region29
  $region28: #{joint_bert_forward.15} parent=0 // pred_region
    _
  $region29: #{joint_bert_forward.15} parent=0 // pred_fallthru
    _

// kernel: joint_bert_forward.16
$region0: #{joint_bert_forward.16}
  #allocation0 [shape = 'u32[]', space=smem, size = 0x4, offset = 0x4, fixed_abs, tag = 'smem constant byte address 0x4 - core index']
  #allocation1 [shape = 'u32[72,128]{1,0:T(1,128)}', space=vmem, size = 0x9000, scoped, tag = 'internal scratch']
  %s0 = inlined_call_operand.vmem [shape: bf16[2,8,96], index: 0, kind: input, shape index: {}]
  %s1 = inlined_call_operand.vmem [shape: f32[2,1,8], index: 1, kind: input, shape index: {}]
  %s2 = inlined_call_operand.vmem [shape: bf16[2,8,32], index: 2, kind: output, shape index: {}]
  %s3 = sld [smem:[#allocation0]]
  $region41: #{joint_bert_forward.16} parent=0
    _
  %s5 = ssub.s32 1, %s3
  %s6 = scalar_select 0, %s5, %s3
  loop: start=0, step=1, limit=4
  $region2: #{joint_bert_forward.16} parent=0 // loop_pre_header
    _
  $region3: #{joint_bert_forward.16} parent=0 // loop_header
    %s8 = sphi 0, %s12
    %p9 = scmp.ge.s32.totalorder %s8, 4
    %s18 = sphi 0, %s20
    %s21 = sphi 0, %s18
    %s22 = sphi 0, %s21
    %s38 = sphi 0, %s22
    %s44 = sphi 0, %s46
    %s47 = sphi 0, %s44
    %s48 = sphi 0, %s47
    %s64 = sphi 0, %s48
    %s70 = sphi 0, %s72
    %s73 = sphi 0, %s70
    %s74 = sphi 0, %s73
    %s90 = sphi 0, %s74
  $region4: #{joint_bert_forward.16} parent=0 // loop_header_branch
    %11 = sbr.rel (%p9) target = $region8
  $region5: #{joint_bert_forward.16} parent=0 // loop_body
    %s13 = ssub.s32 %s8, 1
    %s14 = ssub.s32 %s8, 2
    %s15 = sadd.s32 %s8, 1
    %s16 = ssub.s32 %s8, %s15
    %p17 = scmp.eq.s32.totalorder %s16, 0
    %s19 = sadd.s32 %s18, 1
    %s20 = scalar_select %p17, %s18, %s19
    %p23 = pneg %p17
    %p24 = scmp.eq.s32.totalorder %s8, 1
    %p25 = por %p23, %p24
    %p26 = scmp.ne.s32.totalorder %s18, %s21
    %p27 = scmp.eq.s32.totalorder %s8, 0
    %p28 = por %p26, %p27
    %p29 = scmp.ne.s32.totalorder %s18, %s21
    %p30 = scmp.eq.s32.totalorder %s13, 1
    %p31 = por %p29, %p30
    %p32 = scmp.ne.s32.totalorder %s21, %s22
    %p33 = scmp.eq.s32.totalorder %s13, 0
    %p34 = por %p32, %p33
    %p35 = scmp.ne.s32.totalorder %s21, %s22
    %p36 = scmp.eq.s32.totalorder %s14, 1
    %p37 = por %p35, %p36
    %p39 = scmp.ne.s32.totalorder %s22, %s38
    %p40 = scmp.eq.s32.totalorder %s14, 0
    %p41 = por %p39, %p40
    %s42 = ssub.s32 %s8, %s15
    %p43 = scmp.eq.s32.totalorder %s42, 0
    %s45 = sadd.s32 %s44, 1
    %s46 = scalar_select %p43, %s44, %s45
    %p49 = pneg %p43
    %p50 = scmp.eq.s32.totalorder %s8, 1
    %p51 = por %p49, %p50
    %p52 = scmp.ne.s32.totalorder %s44, %s47
    %p53 = scmp.eq.s32.totalorder %s8, 0
    %p54 = por %p52, %p53
    %p55 = scmp.ne.s32.totalorder %s44, %s47
    %p56 = scmp.eq.s32.totalorder %s13, 1
    %p57 = por %p55, %p56
    %p58 = scmp.ne.s32.totalorder %s47, %s48
    %p59 = scmp.eq.s32.totalorder %s13, 0
    %p60 = por %p58, %p59
    %p61 = scmp.ne.s32.totalorder %s47, %s48
    %p62 = scmp.eq.s32.totalorder %s14, 1
    %p63 = por %p61, %p62
    %p65 = scmp.ne.s32.totalorder %s48, %s64
    %p66 = scmp.eq.s32.totalorder %s14, 0
    %p67 = por %p65, %p66
    %s68 = ssub.s32 %s8, %s15
    %p69 = scmp.eq.s32.totalorder %s68, 0
    %s71 = sadd.s32 %s70, 1
    %s72 = scalar_select %p69, %s70, %s71
    %p75 = pneg %p69
    %p76 = scmp.eq.s32.totalorder %s8, 1
    %p77 = por %p75, %p76
    %p78 = scmp.ne.s32.totalorder %s70, %s73
    %p79 = scmp.eq.s32.totalorder %s8, 0
    %p80 = por %p78, %p79
    %p81 = scmp.ne.s32.totalorder %s70, %s73
    %p82 = scmp.eq.s32.totalorder %s13, 1
    %p83 = por %p81, %p82
    %p84 = scmp.ne.s32.totalorder %s73, %s74
    %p85 = scmp.eq.s32.totalorder %s13, 0
    %p86 = por %p84, %p85
    %p87 = scmp.ne.s32.totalorder %s73, %s74
    %p88 = scmp.eq.s32.totalorder %s14, 1
    %p89 = por %p87, %p88
    %p91 = scmp.ne.s32.totalorder %s74, %s90
    %p92 = scmp.eq.s32.totalorder %s14, 0
    %p93 = por %p91, %p92
    %p94 = scmp.le.s32.totalorder 1, %s8
    %p95 = scmp.lt.s32.totalorder %s8, 3
    %p96 = pnand %p94, %p95
    %p97 = pneg %p96
    // Predicated region
    $region9: #{joint_bert_forward.16} parent=5 // pred_check
      _
    $region10: #{joint_bert_forward.16} parent=5 // pred_check_branch
      %99 = sbr.rel (%p96) target = $region12
    $region11: #{joint_bert_forward.16} parent=5 // pred_region
      %s100 = ssub.s32 %s8, 1
    $region12: #{joint_bert_forward.16} parent=5 // pred_fallthru
      _
    %p101 = scmp.lt.s32.totalorder %s8, 2
    // Predicated region
    $region13: #{joint_bert_forward.16} parent=5 // pred_check
      %p102 = pneg %p101
    $region14: #{joint_bert_forward.16} parent=5 // pred_check_branch
      %104 = sbr.rel (%p102) target = $region16
    $region15: #{joint_bert_forward.16} parent=5 // pred_region
      // Predicated region
      $region17: #{joint_bert_forward.16} parent=15 // pred_check
        %p105 = pneg %p28
      $region18: #{joint_bert_forward.16} parent=15 // pred_check_branch
        %107 = sbr.rel (%p105) target = $region20
      $region19: #{joint_bert_forward.16} parent=15 // pred_region
        %p108 = scmp.lt.s32.totalorder %s8, 1
        %s109 = scalar_select %p108, %s8, 1
        %s110 = smul.addr %s109, 4
        %s111 = scalar_lea.vmem %s0, %s110
      $region20: #{joint_bert_forward.16} parent=15 // pred_fallthru
        _
      // Predicated region
      $region21: #{joint_bert_forward.16} parent=15 // pred_check
        %p112 = pneg %p54
      $region22: #{joint_bert_forward.16} parent=15 // pred_check_branch
        %114 = sbr.rel (%p112) target = $region24
      $region23: #{joint_bert_forward.16} parent=15 // pred_region
        %p115 = scmp.lt.s32.totalorder %s8, 1
        %s116 = scalar_select %p115, %s8, 1
        %s117 = scalar_lea.vmem %s1, %s116
      $region24: #{joint_bert_forward.16} parent=15 // pred_fallthru
        _
    $region16: #{joint_bert_forward.16} parent=5 // pred_fallthru
      _
    %p118 = scmp.le.s32.totalorder 1, %s8
    %p119 = scmp.lt.s32.totalorder %s8, 3
    %p120 = pnand %p118, %p119
    %p121 = pneg %p120
    // Predicated region
    $region25: #{joint_bert_forward.16} parent=5 // pred_check
      _
    $region26: #{joint_bert_forward.16} parent=5 // pred_check_branch
      %123 = sbr.rel (%p120) target = $region28
    $region27: #{joint_bert_forward.16} parent=5 // pred_region
      %s124 = ssub.s32 %s8, 1
      %p125 = scmp.lt.s32.totalorder %s13, 1
      %s126 = scalar_select %p125, %s13, 1
      %s127 = smul.addr %s126, 4
      %s128 = scalar_lea.vmem %s0, %s127
      %p129 = pneg %p34
      %p130 = pneg %p31
      %p131 = scmp.lt.s32.totalorder %s13, 1
      %s132 = scalar_select %p131, %s13, 1
      %s133 = scalar_lea.vmem %s1, %s132
      %p134 = pneg %p60
      %p135 = pneg %p57
      %p136 = pneg %p86
      %p137 = pneg %p83
      %p138 = scmp.lt.s32.totalorder %s13, 1
      %s139 = scalar_select %p138, %s13, 1
      %s140 = smul.addr %s139, 4
      %s141 = scalar_lea.vmem %s2, %s140
      %p142 = scmp.lt.s32.totalorder %s13, 1
      %s143 = scalar_select %p142, %s13, 1
      %s144 = smul.addr %s143, 4
      %s145 = scalar_lea.vmem %s0, %s144
      %p146 = scmp.lt.s32.totalorder %s13, 1
      %s147 = scalar_select %p146, %s13, 1
      %s148 = scalar_lea.vmem %s1, %s147
      %p149 = scmp.lt.s32.totalorder %s13, 1
      %s150 = scalar_select %p149, %s13, 1
      %s151 = smul.addr %s150, 4
      %s152 = scalar_lea.vmem %s2, %s151
      %v154 = vld [vmem:[%s145] sm:$0xf]
      %v155 = vld [vmem:[%s148] sm:$0x1]
      %v157 = vunpack.c.l.b16 %v154
      %v158 = vpack.c.b16 %v157, %v157
      %159 = vrot.lane.b32.xlu0 %v158, 96
      %v160 = vpop.permute.xlu0 %159
      %vm161 = vcmask 130048
      %v163 = vsel %vm161, %v154, 0
      %v166 = vsel %vm161, %v160, 0
      %168 = vmatpush.bf16.xpose.msra.mxu0 0
      %169 = vmatpush.bf16.xpose.msra.mxu0 0
      %170 = vmatpush.bf16.xpose.msra.mxu0 0
      %171 = vmatpush.bf16.xpose.msra.mxu0 0
      %172 = vmatpush.bf16.xpose.msra.mxu0 0
      %173 = vmatpush.bf16.xpose.msra.mxu0 0
      %174 = vmatpush.bf16.xpose.msra.mxu0 0
      %175 = vmatpush.bf16.xpose.msra.mxu0 %v166
      %176 = vmatmul.bf16.gmra.mxu0 %v163
      %v177 = vpop.f32.mrf.mxu0
      %v178 = vadd.f32 0.0, %v177
      %v179 = vpop.f32.mrf.mxu0
      %180 = vdwg.mxu0
      %v181 = vmul.f32 %v178, 0.25
      %v183 = vperm.slane %v155, 0
      %v185 = vadd.f32 %v181, %v183
      %vm186 = vcmask 64512
      %v187 = vsel %vm186, %v185, -inf
      %188 = vmax.xlane.f32.xlu0 %v187
      %v189 = vpop.xlane.xlu0 %188
      %v190 = vsub.f32 %v185, %v189
      %v191 = vmul.f32 %v190, 1.442695
      %v192 = vpow.pop %v191
      %v193 = vsel %vm186, %v192, 0.0
      %194 = vadd.xlane.f32.xlu0 %v193
      %v195 = vpop.xlane.xlu0 %194
      %v196 = vrcp.pop %v195
      %v197 = vmul.f32 %v192, %v196
      %v198 = vpack.c.bf16 %v197, %v197
      %199 = vrot.lane.b32.xlu0 %v158, 64
      %v200 = vpop.permute.xlu0 %199
      %v202 = vsel %vm186, %v198, 0
      %vm204 = vcmask 1043456
      %v206 = vsel %vm204, %v200, 0
      %208 = vmatpush.bf16.msra.mxu0 0
      %209 = vmatpush.bf16.msra.mxu0 0
      %210 = vmatpush.bf16.msra.mxu0 0
      %211 = vmatpush.bf16.msra.mxu0 0
      %212 = vmatpush.bf16.msra.mxu0 0
      %213 = vmatpush.bf16.msra.mxu0 0
      %214 = vmatpush.bf16.msra.mxu0 0
      %215 = vmatpush.bf16.msra.mxu0 %v206
      %216 = vmatmul.bf16.gmra.mxu0 %v202
      %v217 = vpop.f32.mrf.mxu0
      %v218 = vadd.f32 0.0, %v217
      %v219 = vpop.f32.mrf.mxu0
      %220 = vdwg.mxu0
      %221 = vrot.lane.b32.xlu0 %v158, 112
      %v222 = vpop.permute.xlu0 %221
      %223 = vrot.lane.b32.xlu0 %v158, 80
      %v224 = vpop.permute.xlu0 %223
      %v226 = vsel %vm161, %v222, 0
      %v229 = vsel %vm161, %v224, 0
      %231 = vmatpush.bf16.xpose.msra.mxu0 0
      %232 = vmatpush.bf16.xpose.msra.mxu0 0
      %233 = vmatpush.bf16.xpose.msra.mxu0 0
      %234 = vmatpush.bf16.xpose.msra.mxu0 0
      %235 = vmatpush.bf16.xpose.msra.mxu0 0
      %236 = vmatpush.bf16.xpose.msra.mxu0 0
      %237 = vmatpush.bf16.xpose.msra.mxu0 0
      %238 = vmatpush.bf16.xpose.msra.mxu0 %v229
      %239 = vmatmul.bf16.gmra.mxu0 %v226
      %v240 = vpop.f32.mrf.mxu0
      %v241 = vadd.f32 0.0, %v240
      %v242 = vpop.f32.mrf.mxu0
      %243 = vdwg.mxu0
      %v244 = vmul.f32 %v241, 0.25
      %v245 = vadd.f32 %v244, %v183
      %v246 = vsel %vm186, %v245, -inf
      %247 = vmax.xlane.f32.xlu0 %v246
      %v248 = vpop.xlane.xlu0 %247
      %v249 = vsub.f32 %v245, %v248
      %v250 = vmul.f32 %v249, 1.442695
      %v251 = vpow.pop %v250
      %v252 = vsel %vm186, %v251, 0.0
      %253 = vadd.xlane.f32.xlu0 %v252
      %v254 = vpop.xlane.xlu0 %253
      %v255 = vrcp.pop %v254
      %v256 = vmul.f32 %v251, %v255
      %v257 = vpack.c.bf16 %v256, %v256
      %258 = vrot.lane.b32.xlu0 %v158, 48
      %v259 = vpop.permute.xlu0 %258
      %v261 = vsel %vm186, %v257, 0
      %v264 = vsel %vm204, %v259, 0
      %266 = vmatpush.bf16.msra.mxu0 0
      %267 = vmatpush.bf16.msra.mxu0 0
      %268 = vmatpush.bf16.msra.mxu0 0
      %269 = vmatpush.bf16.msra.mxu0 0
      %270 = vmatpush.bf16.msra.mxu0 0
      %271 = vmatpush.bf16.msra.mxu0 0
      %272 = vmatpush.bf16.msra.mxu0 0
      %273 = vmatpush.bf16.msra.mxu0 %v264
      %274 = vmatmul.bf16.gmra.mxu0 %v261
      %v275 = vpop.f32.mrf.mxu0
      %v276 = vadd.f32 0.0, %v275
      %v277 = vpop.f32.mrf.mxu0
      %278 = vdwg.mxu0
      %280 = vrot.lane.b32.xlu0 %v276, 16
      %v281 = vpop.permute.xlu0 %280
      %v283 = vsel %vm161, %v218, %v281
      %v284 = vpack.c.bf16 %v283, %v283
      %vm285 = vcmask 257024
      %286 = vst.msk [vmem:[%s152] sm:$0xf] %vm285, %v284
      %p287 = scmp.lt.s32.totalorder %s13, 1
      %s288 = scalar_select %p287, %s13, 1
      %s289 = smul.addr %s288, 4
      %s290 = scalar_lea.vmem %s2, %s289
      // Predicated region
      $region29: #{joint_bert_forward.16} parent=27 // pred_check
        %p291 = pneg %p83
      $region30: #{joint_bert_forward.16} parent=27 // pred_check_branch
        %293 = sbr.rel (%p291) target = $region32
      $region31: #{joint_bert_forward.16} parent=27 // pred_region
        _
      $region32: #{joint_bert_forward.16} parent=27 // pred_fallthru
        _
    $region28: #{joint_bert_forward.16} parent=5 // pred_fallthru
      _
    %p294 = scmp.le.s32.totalorder 2, %s8
    // Predicated region
    $region33: #{joint_bert_forward.16} parent=5 // pred_check
      %p295 = pneg %p294
    $region34: #{joint_bert_forward.16} parent=5 // pred_check_branch
      %297 = sbr.rel (%p295) target = $region36
    $region35: #{joint_bert_forward.16} parent=5 // pred_region
      %s298 = ssub.s32 %s8, 2
      // Predicated region
      $region37: #{joint_bert_forward.16} parent=35 // pred_check
        %p299 = pneg %p89
      $region38: #{joint_bert_forward.16} parent=35 // pred_check_branch
        %301 = sbr.rel (%p299) target = $region40
      $region39: #{joint_bert_forward.16} parent=35 // pred_region
        %p302 = scmp.lt.s32.totalorder %s14, 1
        %s303 = scalar_select %p302, %s14, 1
        %s304 = smul.addr %s303, 4
        %s305 = scalar_lea.vmem %s2, %s304
      $region40: #{joint_bert_forward.16} parent=35 // pred_fallthru
        _
    $region36: #{joint_bert_forward.16} parent=5 // pred_fallthru
      _
  $region6: #{joint_bert_forward.16} parent=0 // loop_footer
    %s12 = sadd.s32 1, %s8
  $region7: #{joint_bert_forward.16} parent=0 // loop_footer_branch
    %7 = sbr.rel target = $region3
  $region8: #{joint_bert_forward.16} parent=0 // loop_exit
    _

// kernel: joint_bert_forward.17
$region0: #{joint_bert_forward.17}
  #allocation0 [shape = 'u32[]', space=smem, size = 0x4, offset = 0x4, fixed_abs, tag = 'smem constant byte address 0x4 - core index']
  #allocation1 [shape = 'u32[72,128]{1,0:T(1,128)}', space=vmem, size = 0x9000, scoped, tag = 'internal scratch']
  #allocation2 [shape = 'f32[16,32]{1,0:T(8,128)}', space=vmem, size = 0x2000, scoped, tag = 'scratch operand']
  %s0 = inlined_call_operand.vmem [shape: bf16[16,32], index: 0, kind: input, shape index: {}]
  %s1 = inlined_call_operand.vmem [shape: bf16[32,32], index: 1, kind: input, shape index: {}]
  %s2 = inlined_call_operand.vmem [shape: f32[1,32], index: 2, kind: input, shape index: {}]
  %s3 = inlined_call_operand.vmem [shape: bf16[16,32], index: 3, kind: input, shape index: {}]
  %s4 = inlined_call_operand.vmem [shape: f32[1,32], index: 4, kind: input, shape index: {}]
  %s5 = inlined_call_operand.vmem [shape: f32[1,32], index: 5, kind: input, shape index: {}]
  %s6 = inlined_call_operand.vmem [shape: bf16[16,32], index: 6, kind: output, shape index: {}]
  %s7 = sld [smem:[#allocation0]]
  $region42: #{joint_bert_forward.17} parent=0
    _
  %s9 = ssub.s32 1, %s7
  %s10 = scalar_select 0, %s9, %s7
  // Predicated region
  $region2: #{joint_bert_forward.17} parent=0 // pred_check
    _
  $region3: #{joint_bert_forward.17} parent=0 // pred_check_branch
    %12 = sbr.rel (0) target = $region5
  $region4: #{joint_bert_forward.17} parent=0 // pred_region
    _
  $region5: #{joint_bert_forward.17} parent=0 // pred_fallthru
    _
  // Predicated region
  $region6: #{joint_bert_forward.17} parent=0 // pred_check
    _
  $region7: #{joint_bert_forward.17} parent=0 // pred_check_branch
    %14 = sbr.rel (0) target = $region9
  $region8: #{joint_bert_forward.17} parent=0 // pred_region
    _
  $region9: #{joint_bert_forward.17} parent=0 // pred_fallthru
    _
  // Predicated region
  $region10: #{joint_bert_forward.17} parent=0 // pred_check
    _
  $region11: #{joint_bert_forward.17} parent=0 // pred_check_branch
    %16 = sbr.rel (0) target = $region13
  $region12: #{joint_bert_forward.17} parent=0 // pred_region
    _
  $region13: #{joint_bert_forward.17} parent=0 // pred_fallthru
    _
  // Predicated region
  $region14: #{joint_bert_forward.17} parent=0 // pred_check
    _
  $region15: #{joint_bert_forward.17} parent=0 // pred_check_branch
    %18 = sbr.rel (0) target = $region17
  $region16: #{joint_bert_forward.17} parent=0 // pred_region
    _
  $region17: #{joint_bert_forward.17} parent=0 // pred_fallthru
    _
  // Predicated region
  $region18: #{joint_bert_forward.17} parent=0 // pred_check
    _
  $region19: #{joint_bert_forward.17} parent=0 // pred_check_branch
    %20 = sbr.rel (0) target = $region21
  $region20: #{joint_bert_forward.17} parent=0 // pred_region
    _
  $region21: #{joint_bert_forward.17} parent=0 // pred_fallthru
    _
  // Predicated region
  $region22: #{joint_bert_forward.17} parent=0 // pred_check
    _
  $region23: #{joint_bert_forward.17} parent=0 // pred_check_branch
    %22 = sbr.rel (0) target = $region25
  $region24: #{joint_bert_forward.17} parent=0 // pred_region
    _
  $region25: #{joint_bert_forward.17} parent=0 // pred_fallthru
    _
  %p24 = scmp.eq.s32.totalorder 0, 0
  // Predicated region
  $region26: #{joint_bert_forward.17} parent=0 // pred_check
    %p25 = pneg %p24
  $region27: #{joint_bert_forward.17} parent=0 // pred_check_branch
    %27 = sbr.rel (%p25) target = $region29
  $region28: #{joint_bert_forward.17} parent=0 // pred_region
    %vm28 = vcmask 261120
    %29 = vst.msk [vmem:[#allocation2] sm:$0xff] %vm28, 0.0
    %30 = vst.msk [vmem:[#allocation2 + $0x8] sm:$0xff] %vm28, 0.0
  $region29: #{joint_bert_forward.17} parent=0 // pred_fallthru
    _
  %v31 = vld [vmem:[#allocation2] sm:$0xff]
  %v32 = vld [vmem:[#allocation2 + $0x8] sm:$0xff]
  %v33 = vld [vmem:[%s0] sm:$0xf]
  %v34 = vld [vmem:[%s0 + $0x4] sm:$0xf]
  %v35 = vld [vmem:[%s1] sm:$0xf]
  %v36 = vld [vmem:[%s1 + $0x4] sm:$0xf]
  %v37 = vld [vmem:[%s1 + $0x8] sm:$0xf]
  %v38 = vld [vmem:[%s1 + $0xc] sm:$0xf]
  %v41 = vunpack.c.l.b16 %v33
  %v42 = vunpack.c.l.b16 %v34
  %v43 = vpack.c.b16 %v42, %v41
  %v48 = vunpack.c.l.b16 %v35
  %v49 = vunpack.c.l.b16 %v36
  %v50 = vunpack.c.l.b16 %v37
  %v51 = vunpack.c.l.b16 %v38
  %v52 = vpack.c.b16 %v49, %v48
  %v53 = vpack.c.b16 %v51, %v50
  %vm56 = vcmask 261120
  %v58 = vsel %vm56, %v43, 0
  %60 = vmatpush.bf16.msra.mxu0 0
  %61 = vmatpush.bf16.msra.mxu0 0
  %62 = vmatpush.bf16.msra.mxu0 0
  %63 = vmatpush.bf16.msra.mxu0 0
  %64 = vmatpush.bf16.msra.mxu0 0
  %65 = vmatpush.bf16.msra.mxu0 0
  %66 = vmatpush.bf16.msra.mxu0 %v53
  %67 = vmatpush.bf16.msra.mxu0 %v52
  %68 = vmatmul.bf16.gmra.mxu0 %v58
  %v69 = vpop.f32.mrf.mxu0
  %v70 = vadd.f32 0.0, %v69
  %v71 = vpop.f32.mrf.mxu0
  %v72 = vadd.f32 0.0, %v71
  %73 = vdwg.mxu0
  %v74 = vadd.f32 %v31, %v70
  %v75 = vadd.f32 %v32, %v72
  %76 = vst.msk [vmem:[#allocation2] sm:$0xff] %vm56, %v74
  %77 = vst.msk [vmem:[#allocation2 + $0x8] sm:$0xff] %vm56, %v75
  // Predicated region
  $region30: #{joint_bert_forward.17} parent=0 // pred_check
    %p78 = pneg %p24
  $region31: #{joint_bert_forward.17} parent=0 // pred_check_branch
    %80 = sbr.rel (%p78) target = $region33
  $region32: #{joint_bert_forward.17} parent=0 // pred_region
    %v81 = vld [vmem:[#allocation2] sm:$0xff]
    %v82 = vld [vmem:[#allocation2 + $0x8] sm:$0xff]
    %v83 = vld [vmem:[%s2] sm:$0x1]
    %v85 = vperm.slane %v83, 0
    %v87 = vadd.f32 %v81, %v85
    %v88 = vadd.f32 %v82, %v85
    %v89 = vld [vmem:[%s3] sm:$0xf]
    %v90 = vld [vmem:[%s3 + $0x4] sm:$0xf]
    %v91 = vunpack.c.l.bf16 %v89
    %v92 = vunpack.c.l.bf16 %v90
    %v93 = vadd.f32 %v87, %v91
    %v94 = vadd.f32 %v88, %v92
    %v95 = vsel %vm56, %v93, 0.0
    %96 = vadd.xlane.f32.xlu0 %v95
    %v97 = vpop.xlane.xlu0 %96
    %v98 = vsel %vm56, %v94, 0.0
    %99 = vadd.xlane.f32.xlu0 %v98
    %v100 = vpop.xlane.xlu0 %99
    %v101 = vrcp.pop 32.0
    %v102 = vmul.f32 32.0, %v101
    %v103 = vsub.f32 1.0, %v102
    %v104 = vmul.f32 %v101, %v103
    %v105 = vadd.f32 %v101, %v104
    %vm106 = vweird.f32 %v101
    %v107 = vsel %vm106, %v101, %v105
    %v108 = vmul.f32 %v97, %v107
    %v109 = vmul.f32 %v100, %v107
    %v110 = vsub.f32 %v93, %v108
    %v111 = vsub.f32 %v94, %v109
    %v112 = vmul.f32 %v110, %v110
    %v113 = vmul.f32 %v111, %v111
    %v114 = vsel %vm56, %v112, 0.0
    %115 = vadd.xlane.f32.xlu0 %v114
    %v116 = vpop.xlane.xlu0 %115
    %v117 = vsel %vm56, %v113, 0.0
    %118 = vadd.xlane.f32.xlu0 %v117
    %v119 = vpop.xlane.xlu0 %118
    %v120 = vmul.f32 %v116, %v107
    %v121 = vmul.f32 %v119, %v107
    %v122 = vadd.f32 %v120, 1e-12
    %v123 = vadd.f32 %v121, 1e-12
    %v124 = vrsqrt.pop %v122
    %v125 = vmul.f32 %v124, %v122
    %v126 = vmul.f32 %v125, %v124
    %v127 = vmul.f32 0.5, %v126
    %v128 = vsub.f32 1.5, %v127
    %v129 = vmul.f32 %v124, %v128
    %vm130 = vweird.f32 %v122
    %vm131 = vweird.f32 %v124
    %vm132 = vmor %vm130, %vm131
    %v133 = vsel %vm132, %v124, %v129
    %v134 = vrsqrt.pop %v123
    %v135 = vmul.f32 %v134, %v123
    %v136 = vmul.f32 %v135, %v134
    %v137 = vmul.f32 0.5, %v136
    %v138 = vsub.f32 1.5, %v137
    %v139 = vmul.f32 %v134, %v138
    %vm140 = vweird.f32 %v123
    %vm141 = vweird.f32 %v134
    %vm142 = vmor %vm140, %vm141
    %v143 = vsel %vm142, %v134, %v139
    %v144 = vmul.f32 %v110, %v133
    %v145 = vmul.f32 %v111, %v143
    %v146 = vld [vmem:[%s4] sm:$0x1]
    %v148 = vperm.slane %v146, 0
    %v150 = vmul.f32 %v144, %v148
    %v151 = vmul.f32 %v145, %v148
    %v152 = vld [vmem:[%s5] sm:$0x1]
    %v154 = vperm.slane %v152, 0
    %v156 = vadd.f32 %v150, %v154
    %v157 = vadd.f32 %v151, %v154
    %v158 = vpack.c.bf16 %v156, %v156
    %v159 = vpack.c.bf16 %v157, %v157
    %vm160 = vcmask 257024
    %161 = vst.msk [vmem:[%s6] sm:$0xf] %vm160, %v158
    %162 = vst.msk [vmem:[%s6 + $0x4] sm:$0xf] %vm160, %v159
  $region33: #{joint_bert_forward.17} parent=0 // pred_fallthru
    _
  // Predicated region
  $region34: #{joint_bert_forward.17} parent=0 // pred_check
    _
  $region35: #{joint_bert_forward.17} parent=0 // pred_check_branch
    %164 = sbr.rel (0) target = $region37
  $region36: #{joint_bert_forward.17} parent=0 // pred_region
    _
  $region37: #{joint_bert_forward.17} parent=0 // pred_fallthru
    _
  // Predicated region
  $region38: #{joint_bert_forward.17} parent=0 // pred_check
    _
  $region39: #{joint_bert_forward.17} parent=0 // pred_check_branch
    %166 = sbr.rel (0) target = $region41
  $region40: #{joint_bert_forward.17} parent=0 // pred_region
    _
  $region41: #{joint_bert_forward.17} parent=0 // pred_fallthru
    _

// kernel: joint_bert_forward.18
$region0: #{joint_bert_forward.18}
  #allocation0 [shape = 'u32[]', space=smem, size = 0x4, offset = 0x4, fixed_abs, tag = 'smem constant byte address 0x4 - core index']
  #allocation1 [shape = 'u32[72,128]{1,0:T(1,128)}', space=vmem, size = 0x9000, scoped, tag = 'internal scratch']
  #allocation2 [shape = 'f32[16,64]{1,0:T(8,128)}', space=vmem, size = 0x2000, scoped, tag = 'scratch operand']
  %s0 = inlined_call_operand.vmem [shape: bf16[16,32], index: 0, kind: input, shape index: {}]
  %s1 = inlined_call_operand.vmem [shape: bf16[32,64], index: 1, kind: input, shape index: {}]
  %s2 = inlined_call_operand.vmem [shape: f32[1,64], index: 2, kind: input, shape index: {}]
  %s3 = inlined_call_operand.vmem [shape: bf16[16,64], index: 3, kind: output, shape index: {}]
  %s4 = sld [smem:[#allocation0]]
  $region30: #{joint_bert_forward.18} parent=0
    _
  %s6 = ssub.s32 1, %s4
  %s7 = scalar_select 0, %s6, %s4
  // Predicated region
  $region2: #{joint_bert_forward.18} parent=0 // pred_check
    _
  $region3: #{joint_bert_forward.18} parent=0 // pred_check_branch
    %9 = sbr.rel (0) target = $region5
  $region4: #{joint_bert_forward.18} parent=0 // pred_region
    _
  $region5: #{joint_bert_forward.18} parent=0 // pred_fallthru
    _
  // Predicated region
  $region6: #{joint_bert_forward.18} parent=0 // pred_check
    _
  $region7: #{joint_bert_forward.18} parent=0 // pred_check_branch
    %11 = sbr.rel (0) target = $region9
  $region8: #{joint_bert_forward.18} parent=0 // pred_region
    _
  $region9: #{joint_bert_forward.18} parent=0 // pred_fallthru
    _
  // Predicated region
  $region10: #{joint_bert_forward.18} parent=0 // pred_check
    _
  $region11: #{joint_bert_forward.18} parent=0 // pred_check_branch
    %13 = sbr.rel (0) target = $region13
  $region12: #{joint_bert_forward.18} parent=0 // pred_region
    _
  $region13: #{joint_bert_forward.18} parent=0 // pred_fallthru
    _
  %p15 = scmp.eq.s32.totalorder 0, 0
  // Predicated region
  $region14: #{joint_bert_forward.18} parent=0 // pred_check
    %p16 = pneg %p15
  $region15: #{joint_bert_forward.18} parent=0 // pred_check_branch
    %18 = sbr.rel (%p16) target = $region17
  $region16: #{joint_bert_forward.18} parent=0 // pred_region
    %vm19 = vcmask 523264
    %20 = vst.msk [vmem:[#allocation2] sm:$0xff] %vm19, 0.0
    %21 = vst.msk [vmem:[#allocation2 + $0x8] sm:$0xff] %vm19, 0.0
  $region17: #{joint_bert_forward.18} parent=0 // pred_fallthru
    _
  %v22 = vld [vmem:[#allocation2] sm:$0xff]
  %v23 = vld [vmem:[#allocation2 + $0x8] sm:$0xff]
  %v24 = vld [vmem:[%s0] sm:$0xf]
  %v25 = vld [vmem:[%s0 + $0x4] sm:$0xf]
  %v26 = vld [vmem:[%s1] sm:$0xf]
  %v27 = vld [vmem:[%s1 + $0x4] sm:$0xf]
  %v28 = vld [vmem:[%s1 + $0x8] sm:$0xf]
  %v29 = vld [vmem:[%s1 + $0xc] sm:$0xf]
  %v32 = vunpack.c.l.b16 %v24
  %v33 = vunpack.c.l.b16 %v25
  %v34 = vpack.c.b16 %v33, %v32
  %v39 = vunpack.c.l.b16 %v26
  %v40 = vunpack.c.l.b16 %v27
  %v41 = vunpack.c.l.b16 %v28
  %v42 = vunpack.c.l.b16 %v29
  %v43 = vpack.c.b16 %v40, %v39
  %v44 = vpack.c.b16 %v42, %v41
  %vm47 = vcmask 261120
  %v49 = vsel %vm47, %v34, 0
  %51 = vmatpush.bf16.msra.mxu0 0
  %52 = vmatpush.bf16.msra.mxu0 0
  %53 = vmatpush.bf16.msra.mxu0 0
  %54 = vmatpush.bf16.msra.mxu0 0
  %55 = vmatpush.bf16.msra.mxu0 0
  %56 = vmatpush.bf16.msra.mxu0 0
  %57 = vmatpush.bf16.msra.mxu0 %v44
  %58 = vmatpush.bf16.msra.mxu0 %v43
  %59 = vmatmul.bf16.gmra.mxu0 %v49
  %v60 = vpop.f32.mrf.mxu0
  %v61 = vadd.f32 0.0, %v60
  %v62 = vpop.f32.mrf.mxu0
  %v63 = vadd.f32 0.0, %v62
  %64 = vdwg.mxu0
  %v65 = vadd.f32 %v22, %v61
  %v66 = vadd.f32 %v23, %v63
  %vm67 = vcmask 523264
  %68 = vst.msk [vmem:[#allocation2] sm:$0xff] %vm67, %v65
  %69 = vst.msk [vmem:[#allocation2 + $0x8] sm:$0xff] %vm67, %v66
  // Predicated region
  $region18: #{joint_bert_forward.18} parent=0 // pred_check
    %p70 = pneg %p15
  $region19: #{joint_bert_forward.18} parent=0 // pred_check_branch
    %72 = sbr.rel (%p70) target = $region21
  $region20: #{joint_bert_forward.18} parent=0 // pred_region
    %v73 = vld [vmem:[#allocation2] sm:$0xff]
    %v74 = vld [vmem:[#allocation2 + $0x8] sm:$0xff]
    %v75 = vld [vmem:[%s2] sm:$0x1]
    %v77 = vperm.slane %v75, 0
    %v79 = vadd.f32 %v73, %v77
    %v80 = vadd.f32 %v74, %v77
    %v81 = vmul.f32 %v79, 0.5
    %v82 = vmul.f32 %v80, 0.5
    %v83 = vmul.f32 %v79, 0.044715
    %v84 = vmul.f32 %v80, 0.044715
    %v85 = vmul.f32 %v83, %v79
    %v86 = vmul.f32 %v84, %v80
    %v87 = vmul.f32 %v85, %v79
    %v88 = vmul.f32 %v86, %v80
    %v89 = vadd.f32 %v79, %v87
    %v90 = vadd.f32 %v80, %v88
    %v91 = vmul.f32 %v89, 0.7978846
    %v92 = vmul.f32 %v90, 0.7978846
    %v93 = vtanh.pop %v91
    %v94 = vtanh.pop %v92
    %v95 = vadd.f32 %v93, 1.0
    %v96 = vadd.f32 %v94, 1.0
    %v97 = vmul.f32 %v81, %v95
    %v98 = vmul.f32 %v82, %v96
    %v99 = vpack.c.bf16 %v97, %v97
    %v100 = vpack.c.bf16 %v98, %v98
    %vm101 = vcmask 519168
    %102 = vst.msk [vmem:[%s3] sm:$0xf] %vm101, %v99
    %103 = vst.msk [vmem:[%s3 + $0x4] sm:$0xf] %vm101, %v100
  $region21: #{joint_bert_forward.18} parent=0 // pred_fallthru
    _
  // Predicated region
  $region22: #{joint_bert_forward.18} parent=0 // pred_check
    _
  $region23: #{joint_bert_forward.18} parent=0 // pred_check_branch
    %105 = sbr.rel (0) target = $region25
  $region24: #{joint_bert_forward.18} parent=0 // pred_region
    _
  $region25: #{joint_bert_forward.18} parent=0 // pred_fallthru
    _
  // Predicated region
  $region26: #{joint_bert_forward.18} parent=0 // pred_check
    _
  $region27: #{joint_bert_forward.18} parent=0 // pred_check_branch
    %107 = sbr.rel (0) target = $region29
  $region28: #{joint_bert_forward.18} parent=0 // pred_region
    _
  $region29: #{joint_bert_forward.18} parent=0 // pred_fallthru
    _

// kernel: joint_bert_forward.25
$region0: #{joint_bert_forward.25}
  #allocation0 [shape = 'u32[]', space=smem, size = 0x4, offset = 0x4, fixed_abs, tag = 'smem constant byte address 0x4 - core index']
  #allocation1 [shape = 'u32[72,128]{1,0:T(1,128)}', space=vmem, size = 0x9000, scoped, tag = 'internal scratch']
  #allocation2 [shape = 'f32[2,32]{1,0:T(2,128)}', space=vmem, size = 0x400, scoped, tag = 'scratch operand']
  %s0 = inlined_call_operand.vmem [shape: bf16[2,32], index: 0, kind: input, shape index: {}]
  %s1 = inlined_call_operand.vmem [shape: bf16[32,32], index: 1, kind: input, shape index: {}]
  %s2 = inlined_call_operand.vmem [shape: f32[1,32], index: 2, kind: input, shape index: {}]
  %s3 = inlined_call_operand.vmem [shape: bf16[2,32], index: 3, kind: output, shape index: {}]
  %s4 = sld [smem:[#allocation0]]
  $region30: #{joint_bert_forward.25} parent=0
    _
  %s6 = ssub.s32 1, %s4
  %s7 = scalar_select 0, %s6, %s4
  // Predicated region
  $region2: #{joint_bert_forward.25} parent=0 // pred_check
    _
  $region3: #{joint_bert_forward.25} parent=0 // pred_check_branch
    %9 = sbr.rel (0) target = $region5
  $region4: #{joint_bert_forward.25} parent=0 // pred_region
    _
  $region5: #{joint_bert_forward.25} parent=0 // pred_fallthru
    _
  // Predicated region
  $region6: #{joint_bert_forward.25} parent=0 // pred_check
    _
  $region7: #{joint_bert_forward.25} parent=0 // pred_check_branch
    %11 = sbr.rel (0) target = $region9
  $region8: #{joint_bert_forward.25} parent=0 // pred_region
    _
  $region9: #{joint_bert_forward.25} parent=0 // pred_fallthru
    _
  // Predicated region
  $region10: #{joint_bert_forward.25} parent=0 // pred_check
    _
  $region11: #{joint_bert_forward.25} parent=0 // pred_check_branch
    %13 = sbr.rel (0) target = $region13
  $region12: #{joint_bert_forward.25} parent=0 // pred_region
    _
  $region13: #{joint_bert_forward.25} parent=0 // pred_fallthru
    _
  %p15 = scmp.eq.s32.totalorder 0, 0
  // Predicated region
  $region14: #{joint_bert_forward.25} parent=0 // pred_check
    %p16 = pneg %p15
  $region15: #{joint_bert_forward.25} parent=0 // pred_check_branch
    %18 = sbr.rel (%p16) target = $region17
  $region16: #{joint_bert_forward.25} parent=0 // pred_region
    %vm19 = vcmask 254976
    %20 = vst.msk [vmem:[#allocation2] sm:$0x3] %vm19, 0.0
  $region17: #{joint_bert_forward.25} parent=0 // pred_fallthru
    _
  %v21 = vld [vmem:[#allocation2] sm:$0x3]
  %v22 = vld [vmem:[%s0] sm:$0x1]
  %v23 = vld [vmem:[%s1] sm:$0xf]
  %v24 = vld [vmem:[%s1 + $0x4] sm:$0xf]
  %v25 = vld [vmem:[%s1 + $0x8] sm:$0xf]
  %v26 = vld [vmem:[%s1 + $0xc] sm:$0xf]
  %v31 = vunpack.c.l.b16 %v23
  %v32 = vunpack.c.l.b16 %v24
  %v33 = vunpack.c.l.b16 %v25
  %v34 = vunpack.c.l.b16 %v26
  %v35 = vpack.c.b16 %v32, %v31
  %v36 = vpack.c.b16 %v34, %v33
  %vm39 = vcmask 261120
  %v41 = vsel %vm39, %v22, 0
  %43 = vmatpush.bf16.msra.mxu0 0
  %44 = vmatpush.bf16.msra.mxu0 0
  %45 = vmatpush.bf16.msra.mxu0 0
  %46 = vmatpush.bf16.msra.mxu0 0
  %47 = vmatpush.bf16.msra.mxu0 0
  %48 = vmatpush.bf16.msra.mxu0 0
  %49 = vmatpush.bf16.msra.mxu0 %v36
  %50 = vmatpush.bf16.msra.mxu0 %v35
  %51 = vmatmul.bf16.gmra.mxu0 %v41
  %v52 = vpop.f32.mrf.mxu0
  %v53 = vadd.f32 0.0, %v52
  %v54 = vpop.f32.mrf.mxu0
  %55 = vdwg.mxu0
  %v56 = vadd.f32 %v21, %v53
  %vm57 = vcmask 254976
  %58 = vst.msk [vmem:[#allocation2] sm:$0x3] %vm57, %v56
  // Predicated region
  $region18: #{joint_bert_forward.25} parent=0 // pred_check
    %p59 = pneg %p15
  $region19: #{joint_bert_forward.25} parent=0 // pred_check_branch
    %61 = sbr.rel (%p59) target = $region21
  $region20: #{joint_bert_forward.25} parent=0 // pred_region
    %v62 = vld [vmem:[#allocation2] sm:$0x3]
    %v63 = vld [vmem:[%s2] sm:$0x1]
    %v65 = vperm.slane %v63, 0
    %v67 = vadd.f32 %v62, %v65
    %v68 = vtanh.pop %v67
    %v69 = vpack.c.bf16 %v68, %v68
    %vm70 = vcmask 253952
    %71 = vst.msk [vmem:[%s3] sm:$0x1] %vm70, %v69
  $region21: #{joint_bert_forward.25} parent=0 // pred_fallthru
    _
  // Predicated region
  $region22: #{joint_bert_forward.25} parent=0 // pred_check
    _
  $region23: #{joint_bert_forward.25} parent=0 // pred_check_branch
    %73 = sbr.rel (0) target = $region25
  $region24: #{joint_bert_forward.25} parent=0 // pred_region
    _
  $region25: #{joint_bert_forward.25} parent=0 // pred_fallthru
    _
  // Predicated region
  $region26: #{joint_bert_forward.25} parent=0 // pred_check
    _
  $region27: #{joint_bert_forward.25} parent=0 // pred_check_branch
    %75 = sbr.rel (0) target = $region29
  $region28: #{joint_bert_forward.25} parent=0 // pred_region
    _
  $region29: #{joint_bert_forward.25} parent=0 // pred_fallthru
    _

// kernel: joint_bert_forward.26
$region0: #{joint_bert_forward.26}
  #allocation0 [shape = 'u32[]', space=smem, size = 0x4, offset = 0x4, fixed_abs, tag = 'smem constant byte address 0x4 - core index']
  #allocation1 [shape = 'u32[72,128]{1,0:T(1,128)}', space=vmem, size = 0x9000, scoped, tag = 'internal scratch']
  #allocation2 [shape = 'f32[2,128]{1,0:T(2,128)}', space=vmem, size = 0x400, scoped, tag = 'scratch operand']
  %s0 = inlined_call_operand.vmem [shape: bf16[2,32], index: 0, kind: input, shape index: {}]
  %s1 = inlined_call_operand.vmem [shape: bf16[32,128], index: 1, kind: input, shape index: {}]
  %s2 = inlined_call_operand.vmem [shape: f32[1,128], index: 2, kind: input, shape index: {}]
  %s3 = inlined_call_operand.vmem [shape: f32[2,128], index: 3, kind: output, shape index: {}]
  %s4 = sld [smem:[#allocation0]]
  $region30: #{joint_bert_forward.26} parent=0
    _
  %s6 = ssub.s32 1, %s4
  %s7 = scalar_select 0, %s6, %s4
  // Predicated region
  $region2: #{joint_bert_forward.26} parent=0 // pred_check
    _
  $region3: #{joint_bert_forward.26} parent=0 // pred_check_branch
    %9 = sbr.rel (0) target = $region5
  $region4: #{joint_bert_forward.26} parent=0 // pred_region
    _
  $region5: #{joint_bert_forward.26} parent=0 // pred_fallthru
    _
  // Predicated region
  $region6: #{joint_bert_forward.26} parent=0 // pred_check
    _
  $region7: #{joint_bert_forward.26} parent=0 // pred_check_branch
    %11 = sbr.rel (0) target = $region9
  $region8: #{joint_bert_forward.26} parent=0 // pred_region
    _
  $region9: #{joint_bert_forward.26} parent=0 // pred_fallthru
    _
  // Predicated region
  $region10: #{joint_bert_forward.26} parent=0 // pred_check
    _
  $region11: #{joint_bert_forward.26} parent=0 // pred_check_branch
    %13 = sbr.rel (0) target = $region13
  $region12: #{joint_bert_forward.26} parent=0 // pred_region
    _
  $region13: #{joint_bert_forward.26} parent=0 // pred_fallthru
    _
  %p15 = scmp.eq.s32.totalorder 0, 0
  // Predicated region
  $region14: #{joint_bert_forward.26} parent=0 // pred_check
    %p16 = pneg %p15
  $region15: #{joint_bert_forward.26} parent=0 // pred_check_branch
    %18 = sbr.rel (%p16) target = $region17
  $region16: #{joint_bert_forward.26} parent=0 // pred_region
    %19 = vst [vmem:[#allocation2] sm:$0x3] 0.0
  $region17: #{joint_bert_forward.26} parent=0 // pred_fallthru
    _
  %v20 = vld [vmem:[#allocation2] sm:$0x3]
  %v21 = vld [vmem:[%s0] sm:$0x1]
  %v22 = vld [vmem:[%s1] sm:$0xf]
  %v23 = vld [vmem:[%s1 + $0x4] sm:$0xf]
  %v24 = vld [vmem:[%s1 + $0x8] sm:$0xf]
  %v25 = vld [vmem:[%s1 + $0xc] sm:$0xf]
  %v30 = vunpack.c.l.b16 %v22
  %v31 = vunpack.c.l.b16 %v23
  %v32 = vunpack.c.l.b16 %v24
  %v33 = vunpack.c.l.b16 %v25
  %v34 = vpack.c.b16 %v31, %v30
  %v35 = vpack.c.b16 %v33, %v32
  %vm38 = vcmask 261120
  %v40 = vsel %vm38, %v21, 0
  %42 = vmatpush.bf16.msra.mxu0 0
  %43 = vmatpush.bf16.msra.mxu0 0
  %44 = vmatpush.bf16.msra.mxu0 0
  %45 = vmatpush.bf16.msra.mxu0 0
  %46 = vmatpush.bf16.msra.mxu0 0
  %47 = vmatpush.bf16.msra.mxu0 0
  %48 = vmatpush.bf16.msra.mxu0 %v35
  %49 = vmatpush.bf16.msra.mxu0 %v34
  %50 = vmatmul.bf16.gmra.mxu0 %v40
  %v51 = vpop.f32.mrf.mxu0
  %v52 = vadd.f32 0.0, %v51
  %v53 = vpop.f32.mrf.mxu0
  %54 = vdwg.mxu0
  %v55 = vadd.f32 %v20, %v52
  %56 = vst [vmem:[#allocation2] sm:$0x3] %v55
  // Predicated region
  $region18: #{joint_bert_forward.26} parent=0 // pred_check
    %p57 = pneg %p15
  $region19: #{joint_bert_forward.26} parent=0 // pred_check_branch
    %59 = sbr.rel (%p57) target = $region21
  $region20: #{joint_bert_forward.26} parent=0 // pred_region
    %v60 = vld [vmem:[#allocation2] sm:$0x3]
    %v61 = vld [vmem:[%s2] sm:$0x1]
    %v63 = vperm.slane %v61, 0
    %v65 = vadd.f32 %v60, %v63
    %66 = vst [vmem:[%s3] sm:$0x3] %v65
  $region21: #{joint_bert_forward.26} parent=0 // pred_fallthru
    _
  // Predicated region
  $region22: #{joint_bert_forward.26} parent=0 // pred_check
    _
  $region23: #{joint_bert_forward.26} parent=0 // pred_check_branch
    %68 = sbr.rel (0) target = $region25
  $region24: #{joint_bert_forward.26} parent=0 // pred_region
    _
  $region25: #{joint_bert_forward.26} parent=0 // pred_fallthru
    _
  // Predicated region
  $region26: #{joint_bert_forward.26} parent=0 // pred_check
    _
  $region27: #{joint_bert_forward.26} parent=0 // pred_check_branch
    %70 = sbr.rel (0) target = $region29
  $region28: #{joint_bert_forward.26} parent=0 // pred_region
    _
  $region29: #{joint_bert_forward.26} parent=0 // pred_fallthru
    _

// kernel: joint_bert_forward.19
$region0: #{joint_bert_forward.19}
  #allocation0 [shape = 'u32[]', space=smem, size = 0x4, offset = 0x4, fixed_abs, tag = 'smem constant byte address 0x4 - core index']
  #allocation1 [shape = 'u32[72,128]{1,0:T(1,128)}', space=vmem, size = 0x9000, scoped, tag = 'internal scratch']
  #allocation2 [shape = 'f32[16,32]{1,0:T(8,128)}', space=vmem, size = 0x2000, scoped, tag = 'scratch operand']
  %s0 = inlined_call_operand.vmem [shape: bf16[16,64], index: 0, kind: input, shape index: {}]
  %s1 = inlined_call_operand.vmem [shape: bf16[64,32], index: 1, kind: input, shape index: {}]
  %s2 = inlined_call_operand.vmem [shape: f32[1,32], index: 2, kind: input, shape index: {}]
  %s3 = inlined_call_operand.vmem [shape: bf16[16,32], index: 3, kind: input, shape index: {}]
  %s4 = inlined_call_operand.vmem [shape: f32[1,32], index: 4, kind: input, shape index: {}]
  %s5 = inlined_call_operand.vmem [shape: f32[1,32], index: 5, kind: input, shape index: {}]
  %s6 = inlined_call_operand.vmem [shape: bf16[16,32], index: 6, kind: output, shape index: {}]
  %s7 = sld [smem:[#allocation0]]
  $region42: #{joint_bert_forward.19} parent=0
    _
  %s9 = ssub.s32 1, %s7
  %s10 = scalar_select 0, %s9, %s7
  // Predicated region
  $region2: #{joint_bert_forward.19} parent=0 // pred_check
    _
  $region3: #{joint_bert_forward.19} parent=0 // pred_check_branch
    %12 = sbr.rel (0) target = $region5
  $region4: #{joint_bert_forward.19} parent=0 // pred_region
    _
  $region5: #{joint_bert_forward.19} parent=0 // pred_fallthru
    _
  // Predicated region
  $region6: #{joint_bert_forward.19} parent=0 // pred_check
    _
  $region7: #{joint_bert_forward.19} parent=0 // pred_check_branch
    %14 = sbr.rel (0) target = $region9
  $region8: #{joint_bert_forward.19} parent=0 // pred_region
    _
  $region9: #{joint_bert_forward.19} parent=0 // pred_fallthru
    _
  // Predicated region
  $region10: #{joint_bert_forward.19} parent=0 // pred_check
    _
  $region11: #{joint_bert_forward.19} parent=0 // pred_check_branch
    %16 = sbr.rel (0) target = $region13
  $region12: #{joint_bert_forward.19} parent=0 // pred_region
    _
  $region13: #{joint_bert_forward.19} parent=0 // pred_fallthru
    _
  // Predicated region
  $region14: #{joint_bert_forward.19} parent=0 // pred_check
    _
  $region15: #{joint_bert_forward.19} parent=0 // pred_check_branch
    %18 = sbr.rel (0) target = $region17
  $region16: #{joint_bert_forward.19} parent=0 // pred_region
    _
  $region17: #{joint_bert_forward.19} parent=0 // pred_fallthru
    _
  // Predicated region
  $region18: #{joint_bert_forward.19} parent=0 // pred_check
    _
  $region19: #{joint_bert_forward.19} parent=0 // pred_check_branch
    %20 = sbr.rel (0) target = $region21
  $region20: #{joint_bert_forward.19} parent=0 // pred_region
    _
  $region21: #{joint_bert_forward.19} parent=0 // pred_fallthru
    _
  // Predicated region
  $region22: #{joint_bert_forward.19} parent=0 // pred_check
    _
  $region23: #{joint_bert_forward.19} parent=0 // pred_check_branch
    %22 = sbr.rel (0) target = $region25
  $region24: #{joint_bert_forward.19} parent=0 // pred_region
    _
  $region25: #{joint_bert_forward.19} parent=0 // pred_fallthru
    _
  %p24 = scmp.eq.s32.totalorder 0, 0
  // Predicated region
  $region26: #{joint_bert_forward.19} parent=0 // pred_check
    %p25 = pneg %p24
  $region27: #{joint_bert_forward.19} parent=0 // pred_check_branch
    %27 = sbr.rel (%p25) target = $region29
  $region28: #{joint_bert_forward.19} parent=0 // pred_region
    %vm28 = vcmask 261120
    %29 = vst.msk [vmem:[#allocation2] sm:$0xff] %vm28, 0.0
    %30 = vst.msk [vmem:[#allocation2 + $0x8] sm:$0xff] %vm28, 0.0
  $region29: #{joint_bert_forward.19} parent=0 // pred_fallthru
    _
  %v31 = vld [vmem:[#allocation2] sm:$0xff]
  %v32 = vld [vmem:[#allocation2 + $0x8] sm:$0xff]
  %v33 = vld [vmem:[%s0] sm:$0xf]
  %v34 = vld [vmem:[%s0 + $0x4] sm:$0xf]
  %v35 = vld [vmem:[%s1] sm:$0xf]
  %v36 = vld [vmem:[%s1 + $0x4] sm:$0xf]
  %v37 = vld [vmem:[%s1 + $0x8] sm:$0xf]
  %v38 = vld [vmem:[%s1 + $0xc] sm:$0xf]
  %v39 = vld [vmem:[%s1 + $0x10] sm:$0xf]
  %v40 = vld [vmem:[%s1 + $0x14] sm:$0xf]
  %v41 = vld [vmem:[%s1 + $0x18] sm:$0xf]
  %v42 = vld [vmem:[%s1 + $0x1c] sm:$0xf]
  %v45 = vunpack.c.l.b16 %v33
  %v46 = vunpack.c.l.b16 %v34
  %v47 = vpack.c.b16 %v46, %v45
  %v56 = vunpack.c.l.b16 %v35
  %v57 = vunpack.c.l.b16 %v36
  %v58 = vunpack.c.l.b16 %v37
  %v59 = vunpack.c.l.b16 %v38
  %v60 = vunpack.c.l.b16 %v39
  %v61 = vunpack.c.l.b16 %v40
  %v62 = vunpack.c.l.b16 %v41
  %v63 = vunpack.c.l.b16 %v42
  %v64 = vpack.c.b16 %v57, %v56
  %v65 = vpack.c.b16 %v59, %v58
  %v66 = vpack.c.b16 %v61, %v60
  %v67 = vpack.c.b16 %v63, %v62
  %vm72 = vcmask 523264
  %v74 = vsel %vm72, %v47, 0
  %76 = vmatpush.bf16.msra.mxu0 0
  %77 = vmatpush.bf16.msra.mxu0 0
  %78 = vmatpush.bf16.msra.mxu0 0
  %79 = vmatpush.bf16.msra.mxu0 0
  %80 = vmatpush.bf16.msra.mxu0 %v67
  %81 = vmatpush.bf16.msra.mxu0 %v66
  %82 = vmatpush.bf16.msra.mxu0 %v65
  %83 = vmatpush.bf16.msra.mxu0 %v64
  %84 = vmatmul.bf16.gmra.mxu0 %v74
  %v85 = vpop.f32.mrf.mxu0
  %v86 = vadd.f32 0.0, %v85
  %v87 = vpop.f32.mrf.mxu0
  %v88 = vadd.f32 0.0, %v87
  %89 = vdwg.mxu0
  %v90 = vadd.f32 %v31, %v86
  %v91 = vadd.f32 %v32, %v88
  %vm92 = vcmask 261120
  %93 = vst.msk [vmem:[#allocation2] sm:$0xff] %vm92, %v90
  %94 = vst.msk [vmem:[#allocation2 + $0x8] sm:$0xff] %vm92, %v91
  // Predicated region
  $region30: #{joint_bert_forward.19} parent=0 // pred_check
    %p95 = pneg %p24
  $region31: #{joint_bert_forward.19} parent=0 // pred_check_branch
    %97 = sbr.rel (%p95) target = $region33
  $region32: #{joint_bert_forward.19} parent=0 // pred_region
    %v98 = vld [vmem:[#allocation2] sm:$0xff]
    %v99 = vld [vmem:[#allocation2 + $0x8] sm:$0xff]
    %v100 = vld [vmem:[%s2] sm:$0x1]
    %v102 = vperm.slane %v100, 0
    %v104 = vadd.f32 %v98, %v102
    %v105 = vadd.f32 %v99, %v102
    %v106 = vld [vmem:[%s3] sm:$0xf]
    %v107 = vld [vmem:[%s3 + $0x4] sm:$0xf]
    %v108 = vunpack.c.l.bf16 %v106
    %v109 = vunpack.c.l.bf16 %v107
    %v110 = vadd.f32 %v104, %v108
    %v111 = vadd.f32 %v105, %v109
    %v112 = vsel %vm92, %v110, 0.0
    %113 = vadd.xlane.f32.xlu0 %v112
    %v114 = vpop.xlane.xlu0 %113
    %v115 = vsel %vm92, %v111, 0.0
    %116 = vadd.xlane.f32.xlu0 %v115
    %v117 = vpop.xlane.xlu0 %116
    %v118 = vrcp.pop 32.0
    %v119 = vmul.f32 32.0, %v118
    %v120 = vsub.f32 1.0, %v119
    %v121 = vmul.f32 %v118, %v120
    %v122 = vadd.f32 %v118, %v121
    %vm123 = vweird.f32 %v118
    %v124 = vsel %vm123, %v118, %v122
    %v125 = vmul.f32 %v114, %v124
    %v126 = vmul.f32 %v117, %v124
    %v127 = vsub.f32 %v110, %v125
    %v128 = vsub.f32 %v111, %v126
    %v129 = vmul.f32 %v127, %v127
    %v130 = vmul.f32 %v128, %v128
    %v131 = vsel %vm92, %v129, 0.0
    %132 = vadd.xlane.f32.xlu0 %v131
    %v133 = vpop.xlane.xlu0 %132
    %v134 = vsel %vm92, %v130, 0.0
    %135 = vadd.xlane.f32.xlu0 %v134
    %v136 = vpop.xlane.xlu0 %135
    %v137 = vmul.f32 %v133, %v124
    %v138 = vmul.f32 %v136, %v124
    %v139 = vadd.f32 %v137, 1e-12
    %v140 = vadd.f32 %v138, 1e-12
    %v141 = vrsqrt.pop %v139
    %v142 = vmul.f32 %v141, %v139
    %v143 = vmul.f32 %v142, %v141
    %v144 = vmul.f32 0.5, %v143
    %v145 = vsub.f32 1.5, %v144
    %v146 = vmul.f32 %v141, %v145
    %vm147 = vweird.f32 %v139
    %vm148 = vweird.f32 %v141
    %vm149 = vmor %vm147, %vm148
    %v150 = vsel %vm149, %v141, %v146
    %v151 = vrsqrt.pop %v140
    %v152 = vmul.f32 %v151, %v140
    %v153 = vmul.f32 %v152, %v151
    %v154 = vmul.f32 0.5, %v153
    %v155 = vsub.f32 1.5, %v154
    %v156 = vmul.f32 %v151, %v155
    %vm157 = vweird.f32 %v140
    %vm158 = vweird.f32 %v151
    %vm159 = vmor %vm157, %vm158
    %v160 = vsel %vm159, %v151, %v156
    %v161 = vmul.f32 %v127, %v150
    %v162 = vmul.f32 %v128, %v160
    %v163 = vld [vmem:[%s4] sm:$0x1]
    %v165 = vperm.slane %v163, 0
    %v167 = vmul.f32 %v161, %v165
    %v168 = vmul.f32 %v162, %v165
    %v169 = vld [vmem:[%s5] sm:$0x1]
    %v171 = vperm.slane %v169, 0
    %v173 = vadd.f32 %v167, %v171
    %v174 = vadd.f32 %v168, %v171
    %v175 = vpack.c.bf16 %v173, %v173
    %v176 = vpack.c.bf16 %v174, %v174
    %vm177 = vcmask 257024
    %178 = vst.msk [vmem:[%s6] sm:$0xf] %vm177, %v175
    %179 = vst.msk [vmem:[%s6 + $0x4] sm:$0xf] %vm177, %v176
  $region33: #{joint_bert_forward.19} parent=0 // pred_fallthru
    _
  // Predicated region
  $region34: #{joint_bert_forward.19} parent=0 // pred_check
    _
  $region35: #{joint_bert_forward.19} parent=0 // pred_check_branch
    %181 = sbr.rel (0) target = $region37
  $region36: #{joint_bert_forward.19} parent=0 // pred_region
    _
  $region37: #{joint_bert_forward.19} parent=0 // pred_fallthru
    _
  // Predicated region
  $region38: #{joint_bert_forward.19} parent=0 // pred_check
    _
  $region39: #{joint_bert_forward.19} parent=0 // pred_check_branch
    %183 = sbr.rel (0) target = $region41
  $region40: #{joint_bert_forward.19} parent=0 // pred_region
    _
  $region41: #{joint_bert_forward.19} parent=0 // pred_fallthru
    _

// kernel: joint_bert_forward.27
$region0: #{joint_bert_forward.27}
  #allocation0 [shape = 'u32[]', space=smem, size = 0x4, offset = 0x4, fixed_abs, tag = 'smem constant byte address 0x4 - core index']
  #allocation1 [shape = 'u32[72,128]{1,0:T(1,128)}', space=vmem, size = 0x9000, scoped, tag = 'internal scratch']
  #allocation2 [shape = 'f32[16,128]{1,0:T(8,128)}', space=vmem, size = 0x2000, scoped, tag = 'scratch operand']
  %s0 = inlined_call_operand.vmem [shape: bf16[16,32], index: 0, kind: input, shape index: {}]
  %s1 = inlined_call_operand.vmem [shape: bf16[32,128], index: 1, kind: input, shape index: {}]
  %s2 = inlined_call_operand.vmem [shape: f32[1,128], index: 2, kind: input, shape index: {}]
  %s3 = inlined_call_operand.vmem [shape: f32[16,128], index: 3, kind: output, shape index: {}]
  %s4 = sld [smem:[#allocation0]]
  $region30: #{joint_bert_forward.27} parent=0
    _
  %s6 = ssub.s32 1, %s4
  %s7 = scalar_select 0, %s6, %s4
  // Predicated region
  $region2: #{joint_bert_forward.27} parent=0 // pred_check
    _
  $region3: #{joint_bert_forward.27} parent=0 // pred_check_branch
    %9 = sbr.rel (0) target = $region5
  $region4: #{joint_bert_forward.27} parent=0 // pred_region
    _
  $region5: #{joint_bert_forward.27} parent=0 // pred_fallthru
    _
  // Predicated region
  $region6: #{joint_bert_forward.27} parent=0 // pred_check
    _
  $region7: #{joint_bert_forward.27} parent=0 // pred_check_branch
    %11 = sbr.rel (0) target = $region9
  $region8: #{joint_bert_forward.27} parent=0 // pred_region
    _
  $region9: #{joint_bert_forward.27} parent=0 // pred_fallthru
    _
  // Predicated region
  $region10: #{joint_bert_forward.27} parent=0 // pred_check
    _
  $region11: #{joint_bert_forward.27} parent=0 // pred_check_branch
    %13 = sbr.rel (0) target = $region13
  $region12: #{joint_bert_forward.27} parent=0 // pred_region
    _
  $region13: #{joint_bert_forward.27} parent=0 // pred_fallthru
    _
  %p15 = scmp.eq.s32.totalorder 0, 0
  // Predicated region
  $region14: #{joint_bert_forward.27} parent=0 // pred_check
    %p16 = pneg %p15
  $region15: #{joint_bert_forward.27} parent=0 // pred_check_branch
    %18 = sbr.rel (%p16) target = $region17
  $region16: #{joint_bert_forward.27} parent=0 // pred_region
    %19 = vst [vmem:[#allocation2] sm:$0xff] 0.0
    %20 = vst [vmem:[#allocation2 + $0x8] sm:$0xff] 0.0
  $region17: #{joint_bert_forward.27} parent=0 // pred_fallthru
    _
  %v21 = vld [vmem:[#allocation2] sm:$0xff]
  %v22 = vld [vmem:[#allocation2 + $0x8] sm:$0xff]
  %v23 = vld [vmem:[%s0] sm:$0xf]
  %v24 = vld [vmem:[%s0 + $0x4] sm:$0xf]
  %v25 = vld [vmem:[%s1] sm:$0xf]
  %v26 = vld [vmem:[%s1 + $0x4] sm:$0xf]
  %v27 = vld [vmem:[%s1 + $0x8] sm:$0xf]
  %v28 = vld [vmem:[%s1 + $0xc] sm:$0xf]
  %v31 = vunpack.c.l.b16 %v23
  %v32 = vunpack.c.l.b16 %v24
  %v33 = vpack.c.b16 %v32, %v31
  %v38 = vunpack.c.l.b16 %v25
  %v39 = vunpack.c.l.b16 %v26
  %v40 = vunpack.c.l.b16 %v27
  %v41 = vunpack.c.l.b16 %v28
  %v42 = vpack.c.b16 %v39, %v38
  %v43 = vpack.c.b16 %v41, %v40
  %vm46 = vcmask 261120
  %v48 = vsel %vm46, %v33, 0
  %50 = vmatpush.bf16.msra.mxu0 0
  %51 = vmatpush.bf16.msra.mxu0 0
  %52 = vmatpush.bf16.msra.mxu0 0
  %53 = vmatpush.bf16.msra.mxu0 0
  %54 = vmatpush.bf16.msra.mxu0 0
  %55 = vmatpush.bf16.msra.mxu0 0
  %56 = vmatpush.bf16.msra.mxu0 %v43
  %57 = vmatpush.bf16.msra.mxu0 %v42
  %58 = vmatmul.bf16.gmra.mxu0 %v48
  %v59 = vpop.f32.mrf.mxu0
  %v60 = vadd.f32 0.0, %v59
  %v61 = vpop.f32.mrf.mxu0
  %v62 = vadd.f32 0.0, %v61
  %63 = vdwg.mxu0
  %v64 = vadd.f32 %v21, %v60
  %v65 = vadd.f32 %v22, %v62
  %66 = vst [vmem:[#allocation2] sm:$0xff] %v64
  %67 = vst [vmem:[#allocation2 + $0x8] sm:$0xff] %v65
  // Predicated region
  $region18: #{joint_bert_forward.27} parent=0 // pred_check
    %p68 = pneg %p15
  $region19: #{joint_bert_forward.27} parent=0 // pred_check_branch
    %70 = sbr.rel (%p68) target = $region21
  $region20: #{joint_bert_forward.27} parent=0 // pred_region
    %v71 = vld [vmem:[#allocation2] sm:$0xff]
    %v72 = vld [vmem:[#allocation2 + $0x8] sm:$0xff]
    %v73 = vld [vmem:[%s2] sm:$0x1]
    %v75 = vperm.slane %v73, 0
    %v77 = vadd.f32 %v71, %v75
    %v78 = vadd.f32 %v72, %v75
    %79 = vst [vmem:[%s3] sm:$0xff] %v77
    %80 = vst [vmem:[%s3 + $0x8] sm:$0xff] %v78
  $region21: #{joint_bert_forward.27} parent=0 // pred_fallthru
    _
  // Predicated region
  $region22: #{joint_bert_forward.27} parent=0 // pred_check
    _
  $region23: #{joint_bert_forward.27} parent=0 // pred_check_branch
    %82 = sbr.rel (0) target = $region25
  $region24: #{joint_bert_forward.27} parent=0 // pred_region
    _
  $region25: #{joint_bert_forward.27} parent=0 // pred_fallthru
    _
  // Predicated region
  $region26: #{joint_bert_forward.27} parent=0 // pred_check
    _
  $region27: #{joint_bert_forward.27} parent=0 // pred_check_branch
    %84 = sbr.rel (0) target = $region29
  $region28: #{joint_bert_forward.27} parent=0 // pred_region
    _
  $region29: #{joint_bert_forward.27} parent=0 // pred_fallthru
    _

</llo_original>
